<compile_context>
chip_gen: v6e
topology: v6e:2x2x1
jax: 0.10.0
libtpu: 0.0.40
codegen_flags: <defaults>
</compile_context>

<pallas_src>
import functools
import math

import jax
import jax.numpy as jnp
from jax import lax
from jax.experimental import pallas as pl
from jax.experimental.pallas import tpu as pltpu


def _round_up(n: int, m: int) -> int:
    return ((n + m - 1) // m) * m


def _balanced_topk_mlp_kernel(x_ref, wfc1_ref, wfc2_ref, wg_ref, wu_ref, wd_ref,
                              bias_ref, out_ref, h1_ref, acc_ref,
                              *, topk, bank_size):
    """One (token-tile, I-chunk) step of the fused BalancedTopkMLP forward."""
    k = pl.program_id(1)
    n_k = pl.num_programs(1)
    wdt = wg_ref.dtype                    # MXU input dtype (bf16 or f32)
    xc = x_ref[...]                       # (TM, H_pad), already in weight dtype

    @pl.when(k == 0)
    def _():
        # predictor fc_1 depends only on the token tile -> compute once per tile
        h1_ref[...] = jnp.dot(xc, wfc1_ref[...],
                              preferred_element_type=jnp.float32)   # (TM, P_pad) f32
        acc_ref[...] = jnp.zeros_like(acc_ref)

    # ---- predictor: sigmoid(fc_2(fc_1(x))) for this I-chunk ---------------
    logits = jnp.dot(h1_ref[...].astype(wdt), wfc2_ref[...],
                     preferred_element_type=jnp.float32)             # (TM, IC)
    pred = jax.nn.sigmoid(logits)         # f32, strictly positive -> |pred| == pred
    score = pred + bias_ref[...]          # balanced_bias broadcast from (1, IC)

    # ---- BalancedTopk: per-bank rank via lane rotations of the score only --
    # The other bank_size-1 members of an element's bank are fetched with two
    # whole-axis rotations per offset; which candidate is in-bank and its local
    # index are pure functions of position, so no column-id rolls are needed.
    tm, ic = score.shape                  # ic is a multiple of bank_size (chunk-local banks)
    col = lax.broadcasted_iota(jnp.int32, (tm, ic), 1)
    my_local = col % bank_size
    rank = jnp.zeros((tm, ic), jnp.int32)
    for s in range(1, bank_size):
        sa = jnp.roll(score, -s, axis=1)                # bank member at +s
        sb = jnp.roll(score, bank_size - s, axis=1)     # bank member at +s-bank (wrap)
        use_a = my_local < (bank_size - s)              # exactly one candidate is in-bank
        n_score = jnp.where(use_a, sa, sb)
        n_local = (my_local + s) % bank_size
        # neighbor beats me: larger score; ties broken by lower index (torch.topk)
        beats = (n_score > score) | ((n_score == score) & (n_local < my_local))
        rank = rank + beats.astype(jnp.int32)
    mask_val = jnp.where(rank < topk, pred, 0.0)        # == BalancedTopkFunction output

    # ---- gated MLP: accumulate down_proj(mask * silu(gate(x)) * up(x)) -----
    g = jnp.dot(xc, wg_ref[...], preferred_element_type=jnp.float32)   # (TM, IC)
    u = jnp.dot(xc, wu_ref[...], preferred_element_type=jnp.float32)   # (TM, IC)
    h = mask_val * (g * jax.nn.sigmoid(g)) * u                         # f32 element-wise
    acc_ref[...] += jnp.dot(h.astype(wdt), wd_ref[...],
                            preferred_element_type=jnp.float32)        # f32 accumulator

    @pl.when(k == n_k - 1)
    def _():
        out_ref[...] = acc_ref[...].astype(out_ref.dtype)


def balanced_topk_mlp(x, wfc1, wfc2, wg, wu, wd, balanced_bias, *, topk, bank_size,
                      token_tile=256, i_chunk=256, weight_dtype=jnp.bfloat16):
    """Fused BalancedTopkMLP forward. Weights are (in_features, out_features)."""
    B, S, H = x.shape
    T = B * S
    P = wfc1.shape[1]
    I = wfc2.shape[1]
    assert I % bank_size == 0, "intermediate_size must be a multiple of bank_size"
    assert topk <= bank_size

    # ---- lane-dense padding; I padded by whole banks, chunked by whole banks
    lane_bank = (128 * bank_size) // math.gcd(128, bank_size)   # lcm(128, bank_size)
    H_pad = _round_up(H, 128)
    P_pad = _round_up(P, 128)
    I_pad0 = _round_up(I, lane_bank)
    I_chunk = min(_round_up(max(int(i_chunk), lane_bank), lane_bank), I_pad0)
    I_pad = _round_up(I_pad0, I_chunk)
    n_chunks = I_pad // I_chunk
    # padding must be whole (all-zero) banks so fake top-k winners contribute 0
    assert (I_pad - I) % bank_size == 0
    assert I_chunk % bank_size == 0        # banks never span I-chunks

    # ---- token tiling: balanced tiles, >=2 programs when possible (v7x TCs) -
    n_tiles = max(1, -(-T // max(8, int(token_tile))))
    if n_tiles == 1 and T > 8:
        n_tiles = 2
    tile = _round_up(-(-T // n_tiles), 8)
    T_pad = _round_up(T, tile)
    n_tiles = T_pad // tile

    out_dtype = x.dtype
    x2 = jnp.pad(x.reshape(T, H), ((0, T_pad - T), (0, H_pad - H))).astype(weight_dtype)

    def padw(w, rows, cols):
        return jnp.pad(w, ((0, rows - w.shape[0]),
                           (0, cols - w.shape[1]))).astype(weight_dtype)

    wfc1_p = padw(wfc1, H_pad, P_pad)
    wfc2_p = padw(wfc2, P_pad, I_pad)
    wg_p = padw(wg, H_pad, I_pad)
    wu_p = padw(wu, H_pad, I_pad)
    wd_p = padw(wd, I_pad, H_pad)
    bias_p = jnp.pad(balanced_bias.astype(jnp.float32), (0, I_pad - I)).reshape(1, I_pad)

    # ---- VMEM budget (generation-aware cap) ---------------------------------
    itemsize = jnp.dtype(weight_dtype).itemsize
    out_itemsize = jnp.dtype(out_dtype).itemsize
    wfc1_b = H_pad * P_pad * itemsize
    chunk_w_b = (P_pad + 3 * H_pad) * I_chunk * itemsize      # fc_2 + gate + up + down
    x_tile_b = tile * H_pad * itemsize
    out_tile_b = tile * H_pad * out_itemsize
    bias_b = I_chunk * 4
    scratch_b = tile * (P_pad + H_pad) * 4
    temps_b = 12 * tile * I_chunk * 4
    needed = (2 * (wfc1_b + chunk_w_b + x_tile_b + out_tile_b + bias_b)
              + scratch_b + temps_b + (4 << 20))
    try:
        cap = int(pltpu.get_tpu_info().vmem_capacity_bytes)
    except Exception:
        cap = 128 << 20
    cap = (cap * 3) // 4                   # leave headroom for compiler scratch
    vmem_limit = int(min(max(needed, 32 << 20), cap))

    # ---- cost hint: chunked weights re-streamed once per token tile ---------
    flops = 2 * T_pad * (H_pad * P_pad + P_pad * I_pad + 3 * H_pad * I_pad)
    weight_stream_b = n_tiles * ((P_pad + 3 * H_pad) * I_pad * itemsize + I_pad * 4)
    cost = pl.CostEstimate(
        flops=int(flops),
        transcendentals=int(2 * T_pad * I_pad),
        bytes_accessed=int(wfc1_b + weight_stream_b
                           + T_pad * H_pad * (itemsize + out_itemsize)),
    )

    kernel = functools.partial(_balanced_topk_mlp_kernel,
                               topk=topk, bank_size=bank_size)
    out = pl.pallas_call(
        kernel,
        out_shape=jax.ShapeDtypeStruct((T_pad, H_pad), out_dtype),
        grid_spec=pltpu.PrefetchScalarGridSpec(
            num_scalar_prefetch=0,
            grid=(n_tiles, n_chunks),
            in_specs=[
                pl.BlockSpec((tile, H_pad), lambda i, k: (i, 0)),      # x tile (const over k)
                pl.BlockSpec((H_pad, P_pad), lambda i, k: (0, 0)),     # predictor fc_1
                pl.BlockSpec((P_pad, I_chunk), lambda i, k: (0, k)),   # predictor fc_2 chunk
                pl.BlockSpec((H_pad, I_chunk), lambda i, k: (0, k)),   # gate_proj chunk
                pl.BlockSpec((H_pad, I_chunk), lambda i, k: (0, k)),   # up_proj chunk
                pl.BlockSpec((I_chunk, H_pad), lambda i, k: (k, 0)),   # down_proj chunk
                pl.BlockSpec((1, I_chunk), lambda i, k: (0, k)),       # balanced_bias chunk
            ],
            out_specs=pl.BlockSpec((tile, H_pad), lambda i, k: (i, 0)),
            scratch_shapes=[
                pltpu.VMEM((tile, P_pad), jnp.float32),   # predictor hidden (per token tile)
                pltpu.VMEM((tile, H_pad), jnp.float32),   # down_proj f32 accumulator
            ],
        ),
        compiler_params=pltpu.CompilerParams(
            dimension_semantics=("parallel", "arbitrary"),   # tokens shard across TCs (v7x)
            vmem_limit_bytes=vmem_limit,
        ),
        cost_estimate=cost,
    )(x2, wfc1_p, wfc2_p, wg_p, wu_p, wd_p, bias_p)
    return out[:T, :H].reshape(B, S, H)


def _reference(x, wfc1, wfc2, wg, wu, wd, balanced_bias, *, topk, bank_size,
               weight_dtype=jnp.float32):
    """Pure-JAX reference, mirroring the kernel's dtype casts at MXU inputs."""
    B, S, H = x.shape
    I = wfc2.shape[1]
    f32 = jnp.float32
    cast = lambda a: a.astype(weight_dtype)
    x2 = cast(x.reshape(-1, H))
    h1 = jnp.dot(x2, cast(wfc1), preferred_element_type=f32)
    logits = jnp.dot(cast(h1), cast(wfc2), preferred_element_type=f32)
    pred = jax.nn.sigmoid(logits)
    score = jnp.abs(pred) + balanced_bias[None, :].astype(f32)
    s = score.reshape(-1, I // bank_size, bank_size)
    _, idx = lax.top_k(s, topk)
    keep = jnp.sum(jax.nn.one_hot(idx, bank_size, dtype=f32), axis=-2)
    keep = jnp.minimum(keep, 1.0).reshape(-1, I)
    g = jnp.dot(x2, cast(wg), preferred_element_type=f32)
    u = jnp.dot(x2, cast(wu), preferred_element_type=f32)
    h = (pred * keep) * (g * jax.nn.sigmoid(g)) * u
    out = jnp.dot(cast(h), cast(wd), preferred_element_type=f32)
    return out.reshape(B, S, H).astype(x.dtype)


if __name__ == "__main__":
    def linw(k, out_f, in_f):
        # nn.Linear weights are (out, in); generate and transpose to (in, out).
        return (jax.random.normal(k, (out_f, in_f), dtype=jnp.float32)
                / jnp.sqrt(in_f)).T

    def run_case(name, key, B, S, H, I, P, topk, bank, bias_scale, i_chunk):
        kx, k1, k2, k3, k4, k5, kb = jax.random.split(key, 7)
        x = jax.random.normal(kx, (B, S, H), dtype=jnp.float32)
        wfc1 = linw(k1, P, H)   # predictor.fc_1
        wfc2 = linw(k2, I, P)   # predictor.fc_2
        wg = linw(k3, I, H)     # gate_proj
        wu = linw(k4, I, H)     # up_proj
        wd = linw(k5, H, I)     # down_proj
        bias = bias_scale * jax.random.normal(kb, (I,), dtype=jnp.float32)

        # --- f32 weight path: tight check -----------------------------------
        out_f32 = balanced_topk_mlp(x, wfc1, wfc2, wg, wu, wd, bias,
                                    topk=topk, bank_size=bank, i_chunk=i_chunk,
                                    weight_dtype=jnp.float32)
        out_f32 = jax.block_until_ready(out_f32)
        ref_f32 = _reference(x, wfc1, wfc2, wg, wu, wd, bias,
                             topk=topk, bank_size=bank, weight_dtype=jnp.float32)
        assert out_f32.shape == (B, S, H)
        assert jnp.allclose(out_f32, ref_f32, rtol=1e-3, atol=1e-3), f"{name}: f32 mismatch"

        # --- bf16 MXU-input path (f32 accumulation): loose check ------------
        out_bf = balanced_topk_mlp(x, wfc1, wfc2, wg, wu, wd, bias,
                                   topk=topk, bank_size=bank, i_chunk=i_chunk,
                                   weight_dtype=jnp.bfloat16)
        out_bf = jax.block_until_ready(out_bf)
        ref_bf = _reference(x, wfc1, wfc2, wg, wu, wd, bias,
                            topk=topk, bank_size=bank, weight_dtype=jnp.bfloat16)
        assert jnp.allclose(out_bf, ref_bf, rtol=5e-2, atol=5e-2), f"{name}: bf16 mismatch"

    key = jax.random.PRNGKey(0)
    k1, k2 = jax.random.split(key)
    # hidden=32, intermediate=64, predictor_hidden=16, topk=2, bank=8 (1 I-chunk)
    run_case("small", k1, B=2, S=8, H=32, I=64, P=16, topk=2, bank=8,
             bias_scale=0.0, i_chunk=256)
    # intermediate=256 with i_chunk=128 -> exercises the I-reduction grid axis (2 chunks)
    run_case("chunked", k2, B=2, S=8, H=32, I=256, P=16, topk=2, bank=8,
             bias_scale=0.01, i_chunk=128)
    print("KERNEL_OK")
</pallas_src>

<mosaic_0001>
module attributes {stable_mosaic.version = 11 : i64} {
  func.func @_balanced_topk_mlp_kernel(%arg0: i32, %arg1: i32, %arg2: memref<8x128xf32, #tpu.memory_space<vmem>>, %arg3: memref<128x128xf32, #tpu.memory_space<vmem>>, %arg4: memref<128x128xf32, #tpu.memory_space<vmem>>, %arg5: memref<128x128xf32, #tpu.memory_space<vmem>>, %arg6: memref<128x128xf32, #tpu.memory_space<vmem>>, %arg7: memref<128x128xf32, #tpu.memory_space<vmem>>, %arg8: memref<1x128xf32, #tpu.memory_space<vmem>>, %arg9: memref<8x128xf32, #tpu.memory_space<vmem>>, %arg10: memref<8x128xf32, #tpu.memory_space<vmem>>, %arg11: memref<8x128xf32, #tpu.memory_space<vmem>>) attributes {dimension_semantics = [#tpu.dimension_semantics<parallel>, #tpu.dimension_semantics<arbitrary>], iteration_bounds = array<i64: 2, 1>, scalar_prefetch = 0 : i64, scratch_operands = 2 : i64, tpu.core_type = #tpu.core_type<tc>, window_params = [{transform_indices = @transform_0, window_bounds = array<i64: 8, 128>}, {pipeline_mode = #tpu.pipeline_mode<synchronous>, transform_indices = @transform_1, window_bounds = array<i64: 128, 128>}, {transform_indices = @transform_2, window_bounds = array<i64: 128, 128>}, {transform_indices = @transform_3, window_bounds = array<i64: 128, 128>}, {transform_indices = @transform_4, window_bounds = array<i64: 128, 128>}, {transform_indices = @transform_5, window_bounds = array<i64: 128, 128>}, {transform_indices = @transform_6, window_bounds = array<i64: 1, 128>}, {transform_indices = @transform_7, window_bounds = array<i64: 8, 128>}]} {
    %c0 = arith.constant 0 : index
    %c0_0 = arith.constant 0 : index
    %0 = vector.load %arg2[%c0, %c0_0] : memref<8x128xf32, #tpu.memory_space<vmem>>, vector<8x128xf32>
    %c0_i32 = arith.constant 0 : i32
    %1 = arith.cmpi eq, %arg1, %c0_i32 : i32
    %2 = arith.extui %1 : i1 to i32
    %c0_i32_1 = arith.constant 0 : i32
    %3 = arith.cmpi ne, %2, %c0_i32_1 : i32
    scf.if %3 {
      %c0_82 = arith.constant 0 : index
      %c0_83 = arith.constant 0 : index
      %295 = vector.load %arg3[%c0_82, %c0_83] : memref<128x128xf32, #tpu.memory_space<vmem>>, vector<128x128xf32>
      %cst_84 = arith.constant dense<0.000000e+00> : vector<8x128xf32>
      %296 = tpu.matmul %0, %295, %cst_84 {dimension_numbers = #tpu.dot_dimension_numbers<[1], [0], [0], [1], [0, 0, 1, 1], [], []>} : vector<8x128xf32>, vector<128x128xf32>, vector<8x128xf32> -> vector<8x128xf32>
      %c0_85 = arith.constant 0 : index
      %c0_86 = arith.constant 0 : index
      %297 = vector.load %arg10[%c0_85, %c0_86] : memref<8x128xf32, #tpu.memory_space<vmem>>, vector<8x128xf32>
      tpu.vector_store %arg10[%c0_85, %c0_86], %296 {strides = array<i32>} : memref<8x128xf32, #tpu.memory_space<vmem>>, vector<8x128xf32>,
      %cst_87 = arith.constant 0.000000e+00 : f32
      %298 = vector.broadcast %cst_87 : f32 to vector<8x128xf32>
      %c0_88 = arith.constant 0 : index
      %c0_89 = arith.constant 0 : index
      %299 = vector.load %arg11[%c0_88, %c0_89] : memref<8x128xf32, #tpu.memory_space<vmem>>, vector<8x128xf32>
      tpu.vector_store %arg11[%c0_88, %c0_89], %298 {strides = array<i32>} : memref<8x128xf32, #tpu.memory_space<vmem>>, vector<8x128xf32>,
    } else {
    }
    %c0_2 = arith.constant 0 : index
    %c0_3 = arith.constant 0 : index
    %4 = vector.load %arg10[%c0_2, %c0_3] : memref<8x128xf32, #tpu.memory_space<vmem>>, vector<8x128xf32>
    %c0_4 = arith.constant 0 : index
    %c0_5 = arith.constant 0 : index
    %5 = vector.load %arg4[%c0_4, %c0_5] : memref<128x128xf32, #tpu.memory_space<vmem>>, vector<128x128xf32>
    %cst = arith.constant dense<0.000000e+00> : vector<8x128xf32>
    %6 = tpu.matmul %4, %5, %cst {dimension_numbers = #tpu.dot_dimension_numbers<[1], [0], [0], [1], [0, 0, 1, 1], [], []>} : vector<8x128xf32>, vector<128x128xf32>, vector<8x128xf32> -> vector<8x128xf32>
    %7 = arith.negf %6 : vector<8x128xf32>
    %8 = math.exp %7 : vector<8x128xf32>
    %cst_6 = arith.constant 1.000000e+00 : f32
    %9 = vector.broadcast %cst_6 : f32 to vector<8x128xf32>
    %10 = arith.addf %9, %8 : vector<8x128xf32>
    %11 = arith.divf %9, %10 : vector<8x128xf32>
    %c0_7 = arith.constant 0 : index
    %c0_8 = arith.constant 0 : index
    %12 = vector.load %arg8[%c0_7, %c0_8] : memref<1x128xf32, #tpu.memory_space<vmem>>, vector<1x128xf32>
    %13 = vector.broadcast %12 : vector<1x128xf32> to vector<8x128xf32>
    %14 = arith.addf %11, %13 : vector<8x128xf32>
    %15 = tpu.iota {dimensions = array<i32: 1>} : vector<8x128xi32>
    %c8_i32 = arith.constant 8 : i32
    %c0_i32_9 = arith.constant 0 : i32
    %16 = arith.cmpi eq, %c8_i32, %c0_i32_9 : i32
    %c1_i32 = arith.constant 1 : i32
    %17 = arith.select %16, %c1_i32, %c8_i32 : i32
    %18 = vector.broadcast %17 : i32 to vector<8x128xi32>
    %19 = arith.remsi %15, %18 : vector<8x128xi32>
    %c0_i32_10 = arith.constant 0 : i32
    %20 = vector.broadcast %c0_i32_10 : i32 to vector<8x128xi32>
    %21 = arith.cmpi ne, %19, %20 : vector<8x128xi32>
    %c0_i32_11 = arith.constant 0 : i32
    %22 = vector.broadcast %c0_i32_11 : i32 to vector<8x128xi32>
    %23 = arith.cmpi slt, %19, %22 : vector<8x128xi32>
    %c0_i32_12 = arith.constant 0 : i32
    %24 = arith.cmpi slt, %17, %c0_i32_12 : i32
    %25 = vector.broadcast %24 : i1 to vector<8x128xi1>
    %26 = vector.broadcast %25 : vector<8x128xi1> to vector<8x128xi1>
    %27 = arith.xori %23, %26 : vector<8x128xi1>
    %28 = arith.andi %27, %21 : vector<8x128xi1>
    %29 = vector.broadcast %17 : i32 to vector<8x128xi32>
    %30 = arith.addi %19, %29 : vector<8x128xi32>
    %31 = arith.select %28, %30, %19 : vector<8x128xi1>, vector<8x128xi32>
    %c0_i32_13 = arith.constant 0 : i32
    %32 = vector.broadcast %c0_i32_13 : i32 to vector<8x128xi32>
    %33 = vector.extract_strided_slice %14 {offsets = [0, 1], sizes = [8, 127], strides = [1, 1]} : vector<8x128xf32> to vector<8x127xf32>
    %34 = vector.extract_strided_slice %14 {offsets = [0, 0], sizes = [8, 1], strides = [1, 1]} : vector<8x128xf32> to vector<8x1xf32>
    %35 = tpu.concatenate %33, %34 in 1 : vector<8x127xf32>, vector<8x1xf32> -> vector<8x128xf32>
    %36 = vector.extract_strided_slice %14 {offsets = [0, 121], sizes = [8, 7], strides = [1, 1]} : vector<8x128xf32> to vector<8x7xf32>
    %37 = vector.extract_strided_slice %14 {offsets = [0, 0], sizes = [8, 121], strides = [1, 1]} : vector<8x128xf32> to vector<8x121xf32>
    %38 = tpu.concatenate %36, %37 in 1 : vector<8x7xf32>, vector<8x121xf32> -> vector<8x128xf32>
    %c7_i32 = arith.constant 7 : i32
    %39 = vector.broadcast %c7_i32 : i32 to vector<8x128xi32>
    %40 = arith.cmpi slt, %31, %39 : vector<8x128xi32>
    %41 = arith.select %40, %35, %38 : vector<8x128xi1>, vector<8x128xf32>
    %c1_i32_14 = arith.constant 1 : i32
    %42 = vector.broadcast %c1_i32_14 : i32 to vector<8x128xi32>
    %43 = arith.addi %31, %42 : vector<8x128xi32>
    %c8_i32_15 = arith.constant 8 : i32
    %c0_i32_16 = arith.constant 0 : i32
    %44 = arith.cmpi eq, %c8_i32_15, %c0_i32_16 : i32
    %c1_i32_17 = arith.constant 1 : i32
    %45 = arith.select %44, %c1_i32_17, %c8_i32_15 : i32
    %46 = vector.broadcast %45 : i32 to vector<8x128xi32>
    %47 = arith.remsi %43, %46 : vector<8x128xi32>
    %c0_i32_18 = arith.constant 0 : i32
    %48 = vector.broadcast %c0_i32_18 : i32 to vector<8x128xi32>
    %49 = arith.cmpi ne, %47, %48 : vector<8x128xi32>
    %c0_i32_19 = arith.constant 0 : i32
    %50 = vector.broadcast %c0_i32_19 : i32 to vector<8x128xi32>
    %51 = arith.cmpi slt, %47, %50 : vector<8x128xi32>
    %c0_i32_20 = arith.constant 0 : i32
    %52 = arith.cmpi slt, %45, %c0_i32_20 : i32
    %53 = vector.broadcast %52 : i1 to vector<8x128xi1>
    %54 = vector.broadcast %53 : vector<8x128xi1> to vector<8x128xi1>
    %55 = arith.xori %51, %54 : vector<8x128xi1>
    %56 = arith.andi %55, %49 : vector<8x128xi1>
    %57 = vector.broadcast %45 : i32 to vector<8x128xi32>
    %58 = arith.addi %47, %57 : vector<8x128xi32>
    %59 = arith.select %56, %58, %47 : vector<8x128xi1>, vector<8x128xi32>
    %60 = arith.cmpf ogt, %41, %14 : vector<8x128xf32>
    %61 = arith.cmpf oeq, %41, %14 : vector<8x128xf32>
    %62 = arith.cmpi slt, %59, %31 : vector<8x128xi32>
    %63 = arith.andi %61, %62 : vector<8x128xi1>
    %64 = arith.ori %60, %63 : vector<8x128xi1>
    %65 = arith.extui %64 : vector<8x128xi1> to vector<8x128xi32>
    %66 = arith.addi %32, %65 : vector<8x128xi32>
    %67 = vector.extract_strided_slice %14 {offsets = [0, 2], sizes = [8, 126], strides = [1, 1]} : vector<8x128xf32> to vector<8x126xf32>
    %68 = vector.extract_strided_slice %14 {offsets = [0, 0], sizes = [8, 2], strides = [1, 1]} : vector<8x128xf32> to vector<8x2xf32>
    %69 = tpu.concatenate %67, %68 in 1 : vector<8x126xf32>, vector<8x2xf32> -> vector<8x128xf32>
    %70 = vector.extract_strided_slice %14 {offsets = [0, 122], sizes = [8, 6], strides = [1, 1]} : vector<8x128xf32> to vector<8x6xf32>
    %71 = vector.extract_strided_slice %14 {offsets = [0, 0], sizes = [8, 122], strides = [1, 1]} : vector<8x128xf32> to vector<8x122xf32>
    %72 = tpu.concatenate %70, %71 in 1 : vector<8x6xf32>, vector<8x122xf32> -> vector<8x128xf32>
    %c6_i32 = arith.constant 6 : i32
    %73 = vector.broadcast %c6_i32 : i32 to vector<8x128xi32>
    %74 = arith.cmpi slt, %31, %73 : vector<8x128xi32>
    %75 = arith.select %74, %69, %72 : vector<8x128xi1>, vector<8x128xf32>
    %c2_i32 = arith.constant 2 : i32
    %76 = vector.broadcast %c2_i32 : i32 to vector<8x128xi32>
    %77 = arith.addi %31, %76 : vector<8x128xi32>
    %c8_i32_21 = arith.constant 8 : i32
    %c0_i32_22 = arith.constant 0 : i32
    %78 = arith.cmpi eq, %c8_i32_21, %c0_i32_22 : i32
    %c1_i32_23 = arith.constant 1 : i32
    %79 = arith.select %78, %c1_i32_23, %c8_i32_21 : i32
    %80 = vector.broadcast %79 : i32 to vector<8x128xi32>
    %81 = arith.remsi %77, %80 : vector<8x128xi32>
    %c0_i32_24 = arith.constant 0 : i32
    %82 = vector.broadcast %c0_i32_24 : i32 to vector<8x128xi32>
    %83 = arith.cmpi ne, %81, %82 : vector<8x128xi32>
    %c0_i32_25 = arith.constant 0 : i32
    %84 = vector.broadcast %c0_i32_25 : i32 to vector<8x128xi32>
    %85 = arith.cmpi slt, %81, %84 : vector<8x128xi32>
    %c0_i32_26 = arith.constant 0 : i32
    %86 = arith.cmpi slt, %79, %c0_i32_26 : i32
    %87 = vector.broadcast %86 : i1 to vector<8x128xi1>
    %88 = vector.broadcast %87 : vector<8x128xi1> to vector<8x128xi1>
    %89 = arith.xori %85, %88 : vector<8x128xi1>
    %90 = arith.andi %89, %83 : vector<8x128xi1>
    %91 = vector.broadcast %79 : i32 to vector<8x128xi32>
    %92 = arith.addi %81, %91 : vector<8x128xi32>
    %93 = arith.select %90, %92, %81 : vector<8x128xi1>, vector<8x128xi32>
    %94 = arith.cmpf ogt, %75, %14 : vector<8x128xf32>
    %95 = arith.cmpf oeq, %75, %14 : vector<8x128xf32>
    %96 = arith.cmpi slt, %93, %31 : vector<8x128xi32>
    %97 = arith.andi %95, %96 : vector<8x128xi1>
    %98 = arith.ori %94, %97 : vector<8x128xi1>
    %99 = arith.extui %98 : vector<8x128xi1> to vector<8x128xi32>
    %100 = arith.addi %66, %99 : vector<8x128xi32>
    %101 = vector.extract_strided_slice %14 {offsets = [0, 3], sizes = [8, 125], strides = [1, 1]} : vector<8x128xf32> to vector<8x125xf32>
    %102 = vector.extract_strided_slice %14 {offsets = [0, 0], sizes = [8, 3], strides = [1, 1]} : vector<8x128xf32> to vector<8x3xf32>
    %103 = tpu.concatenate %101, %102 in 1 : vector<8x125xf32>, vector<8x3xf32> -> vector<8x128xf32>
    %104 = vector.extract_strided_slice %14 {offsets = [0, 123], sizes = [8, 5], strides = [1, 1]} : vector<8x128xf32> to vector<8x5xf32>
    %105 = vector.extract_strided_slice %14 {offsets = [0, 0], sizes = [8, 123], strides = [1, 1]} : vector<8x128xf32> to vector<8x123xf32>
    %106 = tpu.concatenate %104, %105 in 1 : vector<8x5xf32>, vector<8x123xf32> -> vector<8x128xf32>
    %c5_i32 = arith.constant 5 : i32
    %107 = vector.broadcast %c5_i32 : i32 to vector<8x128xi32>
    %108 = arith.cmpi slt, %31, %107 : vector<8x128xi32>
    %109 = arith.select %108, %103, %106 : vector<8x128xi1>, vector<8x128xf32>
    %c3_i32 = arith.constant 3 : i32
    %110 = vector.broadcast %c3_i32 : i32 to vector<8x128xi32>
    %111 = arith.addi %31, %110 : vector<8x128xi32>
    %c8_i32_27 = arith.constant 8 : i32
    %c0_i32_28 = arith.constant 0 : i32
    %112 = arith.cmpi eq, %c8_i32_27, %c0_i32_28 : i32
    %c1_i32_29 = arith.constant 1 : i32
    %113 = arith.select %112, %c1_i32_29, %c8_i32_27 : i32
    %114 = vector.broadcast %113 : i32 to vector<8x128xi32>
    %115 = arith.remsi %111, %114 : vector<8x128xi32>
    %c0_i32_30 = arith.constant 0 : i32
    %116 = vector.broadcast %c0_i32_30 : i32 to vector<8x128xi32>
    %117 = arith.cmpi ne, %115, %116 : vector<8x128xi32>
    %c0_i32_31 = arith.constant 0 : i32
    %118 = vector.broadcast %c0_i32_31 : i32 to vector<8x128xi32>
    %119 = arith.cmpi slt, %115, %118 : vector<8x128xi32>
    %c0_i32_32 = arith.constant 0 : i32
    %120 = arith.cmpi slt, %113, %c0_i32_32 : i32
    %121 = vector.broadcast %120 : i1 to vector<8x128xi1>
    %122 = vector.broadcast %121 : vector<8x128xi1> to vector<8x128xi1>
    %123 = arith.xori %119, %122 : vector<8x128xi1>
    %124 = arith.andi %123, %117 : vector<8x128xi1>
    %125 = vector.broadcast %113 : i32 to vector<8x128xi32>
    %126 = arith.addi %115, %125 : vector<8x128xi32>
    %127 = arith.select %124, %126, %115 : vector<8x128xi1>, vector<8x128xi32>
    %128 = arith.cmpf ogt, %109, %14 : vector<8x128xf32>
    %129 = arith.cmpf oeq, %109, %14 : vector<8x128xf32>
    %130 = arith.cmpi slt, %127, %31 : vector<8x128xi32>
    %131 = arith.andi %129, %130 : vector<8x128xi1>
    %132 = arith.ori %128, %131 : vector<8x128xi1>
    %133 = arith.extui %132 : vector<8x128xi1> to vector<8x128xi32>
    %134 = arith.addi %100, %133 : vector<8x128xi32>
    %135 = vector.extract_strided_slice %14 {offsets = [0, 4], sizes = [8, 124], strides = [1, 1]} : vector<8x128xf32> to vector<8x124xf32>
    %136 = vector.extract_strided_slice %14 {offsets = [0, 0], sizes = [8, 4], strides = [1, 1]} : vector<8x128xf32> to vector<8x4xf32>
    %137 = tpu.concatenate %135, %136 in 1 : vector<8x124xf32>, vector<8x4xf32> -> vector<8x128xf32>
    %138 = vector.extract_strided_slice %14 {offsets = [0, 124], sizes = [8, 4], strides = [1, 1]} : vector<8x128xf32> to vector<8x4xf32>
    %139 = vector.extract_strided_slice %14 {offsets = [0, 0], sizes = [8, 124], strides = [1, 1]} : vector<8x128xf32> to vector<8x124xf32>
    %140 = tpu.concatenate %138, %139 in 1 : vector<8x4xf32>, vector<8x124xf32> -> vector<8x128xf32>
    %c4_i32 = arith.constant 4 : i32
    %141 = vector.broadcast %c4_i32 : i32 to vector<8x128xi32>
    %142 = arith.cmpi slt, %31, %141 : vector<8x128xi32>
    %143 = arith.select %142, %137, %140 : vector<8x128xi1>, vector<8x128xf32>
    %c4_i32_33 = arith.constant 4 : i32
    %144 = vector.broadcast %c4_i32_33 : i32 to vector<8x128xi32>
    %145 = arith.addi %31, %144 : vector<8x128xi32>
    %c8_i32_34 = arith.constant 8 : i32
    %c0_i32_35 = arith.constant 0 : i32
    %146 = arith.cmpi eq, %c8_i32_34, %c0_i32_35 : i32
    %c1_i32_36 = arith.constant 1 : i32
    %147 = arith.select %146, %c1_i32_36, %c8_i32_34 : i32
    %148 = vector.broadcast %147 : i32 to vector<8x128xi32>
    %149 = arith.remsi %145, %148 : vector<8x128xi32>
    %c0_i32_37 = arith.constant 0 : i32
    %150 = vector.broadcast %c0_i32_37 : i32 to vector<8x128xi32>
    %151 = arith.cmpi ne, %149, %150 : vector<8x128xi32>
    %c0_i32_38 = arith.constant 0 : i32
    %152 = vector.broadcast %c0_i32_38 : i32 to vector<8x128xi32>
    %153 = arith.cmpi slt, %149, %152 : vector<8x128xi32>
    %c0_i32_39 = arith.constant 0 : i32
    %154 = arith.cmpi slt, %147, %c0_i32_39 : i32
    %155 = vector.broadcast %154 : i1 to vector<8x128xi1>
    %156 = vector.broadcast %155 : vector<8x128xi1> to vector<8x128xi1>
    %157 = arith.xori %153, %156 : vector<8x128xi1>
    %158 = arith.andi %157, %151 : vector<8x128xi1>
    %159 = vector.broadcast %147 : i32 to vector<8x128xi32>
    %160 = arith.addi %149, %159 : vector<8x128xi32>
    %161 = arith.select %158, %160, %149 : vector<8x128xi1>, vector<8x128xi32>
    %162 = arith.cmpf ogt, %143, %14 : vector<8x128xf32>
    %163 = arith.cmpf oeq, %143, %14 : vector<8x128xf32>
    %164 = arith.cmpi slt, %161, %31 : vector<8x128xi32>
    %165 = arith.andi %163, %164 : vector<8x128xi1>
    %166 = arith.ori %162, %165 : vector<8x128xi1>
    %167 = arith.extui %166 : vector<8x128xi1> to vector<8x128xi32>
    %168 = arith.addi %134, %167 : vector<8x128xi32>
    %169 = vector.extract_strided_slice %14 {offsets = [0, 5], sizes = [8, 123], strides = [1, 1]} : vector<8x128xf32> to vector<8x123xf32>
    %170 = vector.extract_strided_slice %14 {offsets = [0, 0], sizes = [8, 5], strides = [1, 1]} : vector<8x128xf32> to vector<8x5xf32>
    %171 = tpu.concatenate %169, %170 in 1 : vector<8x123xf32>, vector<8x5xf32> -> vector<8x128xf32>
    %172 = vector.extract_strided_slice %14 {offsets = [0, 125], sizes = [8, 3], strides = [1, 1]} : vector<8x128xf32> to vector<8x3xf32>
    %173 = vector.extract_strided_slice %14 {offsets = [0, 0], sizes = [8, 125], strides = [1, 1]} : vector<8x128xf32> to vector<8x125xf32>
    %174 = tpu.concatenate %172, %173 in 1 : vector<8x3xf32>, vector<8x125xf32> -> vector<8x128xf32>
    %c3_i32_40 = arith.constant 3 : i32
    %175 = vector.broadcast %c3_i32_40 : i32 to vector<8x128xi32>
    %176 = arith.cmpi slt, %31, %175 : vector<8x128xi32>
    %177 = arith.select %176, %171, %174 : vector<8x128xi1>, vector<8x128xf32>
    %c5_i32_41 = arith.constant 5 : i32
    %178 = vector.broadcast %c5_i32_41 : i32 to vector<8x128xi32>
    %179 = arith.addi %31, %178 : vector<8x128xi32>
    %c8_i32_42 = arith.constant 8 : i32
    %c0_i32_43 = arith.constant 0 : i32
    %180 = arith.cmpi eq, %c8_i32_42, %c0_i32_43 : i32
    %c1_i32_44 = arith.constant 1 : i32
    %181 = arith.select %180, %c1_i32_44, %c8_i32_42 : i32
    %182 = vector.broadcast %181 : i32 to vector<8x128xi32>
    %183 = arith.remsi %179, %182 : vector<8x128xi32>
    %c0_i32_45 = arith.constant 0 : i32
    %184 = vector.broadcast %c0_i32_45 : i32 to vector<8x128xi32>
    %185 = arith.cmpi ne, %183, %184 : vector<8x128xi32>
    %c0_i32_46 = arith.constant 0 : i32
    %186 = vector.broadcast %c0_i32_46 : i32 to vector<8x128xi32>
    %187 = arith.cmpi slt, %183, %186 : vector<8x128xi32>
    %c0_i32_47 = arith.constant 0 : i32
    %188 = arith.cmpi slt, %181, %c0_i32_47 : i32
    %189 = vector.broadcast %188 : i1 to vector<8x128xi1>
    %190 = vector.broadcast %189 : vector<8x128xi1> to vector<8x128xi1>
    %191 = arith.xori %187, %190 : vector<8x128xi1>
    %192 = arith.andi %191, %185 : vector<8x128xi1>
    %193 = vector.broadcast %181 : i32 to vector<8x128xi32>
    %194 = arith.addi %183, %193 : vector<8x128xi32>
    %195 = arith.select %192, %194, %183 : vector<8x128xi1>, vector<8x128xi32>
    %196 = arith.cmpf ogt, %177, %14 : vector<8x128xf32>
    %197 = arith.cmpf oeq, %177, %14 : vector<8x128xf32>
    %198 = arith.cmpi slt, %195, %31 : vector<8x128xi32>
    %199 = arith.andi %197, %198 : vector<8x128xi1>
    %200 = arith.ori %196, %199 : vector<8x128xi1>
    %201 = arith.extui %200 : vector<8x128xi1> to vector<8x128xi32>
    %202 = arith.addi %168, %201 : vector<8x128xi32>
    %203 = vector.extract_strided_slice %14 {offsets = [0, 6], sizes = [8, 122], strides = [1, 1]} : vector<8x128xf32> to vector<8x122xf32>
    %204 = vector.extract_strided_slice %14 {offsets = [0, 0], sizes = [8, 6], strides = [1, 1]} : vector<8x128xf32> to vector<8x6xf32>
    %205 = tpu.concatenate %203, %204 in 1 : vector<8x122xf32>, vector<8x6xf32> -> vector<8x128xf32>
    %206 = vector.extract_strided_slice %14 {offsets = [0, 126], sizes = [8, 2], strides = [1, 1]} : vector<8x128xf32> to vector<8x2xf32>
    %207 = vector.extract_strided_slice %14 {offsets = [0, 0], sizes = [8, 126], strides = [1, 1]} : vector<8x128xf32> to vector<8x126xf32>
    %208 = tpu.concatenate %206, %207 in 1 : vector<8x2xf32>, vector<8x126xf32> -> vector<8x128xf32>
    %c2_i32_48 = arith.constant 2 : i32
    %209 = vector.broadcast %c2_i32_48 : i32 to vector<8x128xi32>
    %210 = arith.cmpi slt, %31, %209 : vector<8x128xi32>
    %211 = arith.select %210, %205, %208 : vector<8x128xi1>, vector<8x128xf32>
    %c6_i32_49 = arith.constant 6 : i32
    %212 = vector.broadcast %c6_i32_49 : i32 to vector<8x128xi32>
    %213 = arith.addi %31, %212 : vector<8x128xi32>
    %c8_i32_50 = arith.constant 8 : i32
    %c0_i32_51 = arith.constant 0 : i32
    %214 = arith.cmpi eq, %c8_i32_50, %c0_i32_51 : i32
    %c1_i32_52 = arith.constant 1 : i32
    %215 = arith.select %214, %c1_i32_52, %c8_i32_50 : i32
    %216 = vector.broadcast %215 : i32 to vector<8x128xi32>
    %217 = arith.remsi %213, %216 : vector<8x128xi32>
    %c0_i32_53 = arith.constant 0 : i32
    %218 = vector.broadcast %c0_i32_53 : i32 to vector<8x128xi32>
    %219 = arith.cmpi ne, %217, %218 : vector<8x128xi32>
    %c0_i32_54 = arith.constant 0 : i32
    %220 = vector.broadcast %c0_i32_54 : i32 to vector<8x128xi32>
    %221 = arith.cmpi slt, %217, %220 : vector<8x128xi32>
    %c0_i32_55 = arith.constant 0 : i32
    %222 = arith.cmpi slt, %215, %c0_i32_55 : i32
    %223 = vector.broadcast %222 : i1 to vector<8x128xi1>
    %224 = vector.broadcast %223 : vector<8x128xi1> to vector<8x128xi1>
    %225 = arith.xori %221, %224 : vector<8x128xi1>
    %226 = arith.andi %225, %219 : vector<8x128xi1>
    %227 = vector.broadcast %215 : i32 to vector<8x128xi32>
    %228 = arith.addi %217, %227 : vector<8x128xi32>
    %229 = arith.select %226, %228, %217 : vector<8x128xi1>, vector<8x128xi32>
    %230 = arith.cmpf ogt, %211, %14 : vector<8x128xf32>
    %231 = arith.cmpf oeq, %211, %14 : vector<8x128xf32>
    %232 = arith.cmpi slt, %229, %31 : vector<8x128xi32>
    %233 = arith.andi %231, %232 : vector<8x128xi1>
    %234 = arith.ori %230, %233 : vector<8x128xi1>
    %235 = arith.extui %234 : vector<8x128xi1> to vector<8x128xi32>
    %236 = arith.addi %202, %235 : vector<8x128xi32>
    %237 = vector.extract_strided_slice %14 {offsets = [0, 7], sizes = [8, 121], strides = [1, 1]} : vector<8x128xf32> to vector<8x121xf32>
    %238 = vector.extract_strided_slice %14 {offsets = [0, 0], sizes = [8, 7], strides = [1, 1]} : vector<8x128xf32> to vector<8x7xf32>
    %239 = tpu.concatenate %237, %238 in 1 : vector<8x121xf32>, vector<8x7xf32> -> vector<8x128xf32>
    %240 = vector.extract_strided_slice %14 {offsets = [0, 127], sizes = [8, 1], strides = [1, 1]} : vector<8x128xf32> to vector<8x1xf32>
    %241 = vector.extract_strided_slice %14 {offsets = [0, 0], sizes = [8, 127], strides = [1, 1]} : vector<8x128xf32> to vector<8x127xf32>
    %242 = tpu.concatenate %240, %241 in 1 : vector<8x1xf32>, vector<8x127xf32> -> vector<8x128xf32>
    %c1_i32_56 = arith.constant 1 : i32
    %243 = vector.broadcast %c1_i32_56 : i32 to vector<8x128xi32>
    %244 = arith.cmpi slt, %31, %243 : vector<8x128xi32>
    %245 = arith.select %244, %239, %242 : vector<8x128xi1>, vector<8x128xf32>
    %c7_i32_57 = arith.constant 7 : i32
    %246 = vector.broadcast %c7_i32_57 : i32 to vector<8x128xi32>
    %247 = arith.addi %31, %246 : vector<8x128xi32>
    %c8_i32_58 = arith.constant 8 : i32
    %c0_i32_59 = arith.constant 0 : i32
    %248 = arith.cmpi eq, %c8_i32_58, %c0_i32_59 : i32
    %c1_i32_60 = arith.constant 1 : i32
    %249 = arith.select %248, %c1_i32_60, %c8_i32_58 : i32
    %250 = vector.broadcast %249 : i32 to vector<8x128xi32>
    %251 = arith.remsi %247, %250 : vector<8x128xi32>
    %c0_i32_61 = arith.constant 0 : i32
    %252 = vector.broadcast %c0_i32_61 : i32 to vector<8x128xi32>
    %253 = arith.cmpi ne, %251, %252 : vector<8x128xi32>
    %c0_i32_62 = arith.constant 0 : i32
    %254 = vector.broadcast %c0_i32_62 : i32 to vector<8x128xi32>
    %255 = arith.cmpi slt, %251, %254 : vector<8x128xi32>
    %c0_i32_63 = arith.constant 0 : i32
    %256 = arith.cmpi slt, %249, %c0_i32_63 : i32
    %257 = vector.broadcast %256 : i1 to vector<8x128xi1>
    %258 = vector.broadcast %257 : vector<8x128xi1> to vector<8x128xi1>
    %259 = arith.xori %255, %258 : vector<8x128xi1>
    %260 = arith.andi %259, %253 : vector<8x128xi1>
    %261 = vector.broadcast %249 : i32 to vector<8x128xi32>
    %262 = arith.addi %251, %261 : vector<8x128xi32>
    %263 = arith.select %260, %262, %251 : vector<8x128xi1>, vector<8x128xi32>
    %264 = arith.cmpf ogt, %245, %14 : vector<8x128xf32>
    %265 = arith.cmpf oeq, %245, %14 : vector<8x128xf32>
    %266 = arith.cmpi slt, %263, %31 : vector<8x128xi32>
    %267 = arith.andi %265, %266 : vector<8x128xi1>
    %268 = arith.ori %264, %267 : vector<8x128xi1>
    %269 = arith.extui %268 : vector<8x128xi1> to vector<8x128xi32>
    %270 = arith.addi %236, %269 : vector<8x128xi32>
    %c2_i32_64 = arith.constant 2 : i32
    %271 = vector.broadcast %c2_i32_64 : i32 to vector<8x128xi32>
    %272 = arith.cmpi slt, %270, %271 : vector<8x128xi32>
    %cst_65 = arith.constant 0.000000e+00 : f32
    %273 = vector.broadcast %cst_65 : f32 to vector<8x128xf32>
    %274 = arith.select %272, %11, %273 : vector<8x128xi1>, vector<8x128xf32>
    %c0_66 = arith.constant 0 : index
    %c0_67 = arith.constant 0 : index
    %275 = vector.load %arg5[%c0_66, %c0_67] : memref<128x128xf32, #tpu.memory_space<vmem>>, vector<128x128xf32>
    %cst_68 = arith.constant dense<0.000000e+00> : vector<8x128xf32>
    %276 = tpu.matmul %0, %275, %cst_68 {dimension_numbers = #tpu.dot_dimension_numbers<[1], [0], [0], [1], [0, 0, 1, 1], [], []>} : vector<8x128xf32>, vector<128x128xf32>, vector<8x128xf32> -> vector<8x128xf32>
    %c0_69 = arith.constant 0 : index
    %c0_70 = arith.constant 0 : index
    %277 = vector.load %arg6[%c0_69, %c0_70] : memref<128x128xf32, #tpu.memory_space<vmem>>, vector<128x128xf32>
    %cst_71 = arith.constant dense<0.000000e+00> : vector<8x128xf32>
    %278 = tpu.matmul %0, %277, %cst_71 {dimension_numbers = #tpu.dot_dimension_numbers<[1], [0], [0], [1], [0, 0, 1, 1], [], []>} : vector<8x128xf32>, vector<128x128xf32>, vector<8x128xf32> -> vector<8x128xf32>
    %279 = arith.negf %276 : vector<8x128xf32>
    %280 = math.exp %279 : vector<8x128xf32>
    %cst_72 = arith.constant 1.000000e+00 : f32
    %281 = vector.broadcast %cst_72 : f32 to vector<8x128xf32>
    %282 = arith.addf %281, %280 : vector<8x128xf32>
    %283 = arith.divf %281, %282 : vector<8x128xf32>
    %284 = arith.mulf %276, %283 : vector<8x128xf32>
    %285 = arith.mulf %274, %284 : vector<8x128xf32>
    %286 = arith.mulf %285, %278 : vector<8x128xf32>
    %c0_73 = arith.constant 0 : index
    %c0_74 = arith.constant 0 : index
    %287 = vector.load %arg11[%c0_73, %c0_74] : memref<8x128xf32, #tpu.memory_space<vmem>>, vector<8x128xf32>
    %c0_75 = arith.constant 0 : index
    %c0_76 = arith.constant 0 : index
    %288 = vector.load %arg7[%c0_75, %c0_76] : memref<128x128xf32, #tpu.memory_space<vmem>>, vector<128x128xf32>
    %cst_77 = arith.constant dense<0.000000e+00> : vector<8x128xf32>
    %289 = tpu.matmul %286, %288, %cst_77 {dimension_numbers = #tpu.dot_dimension_numbers<[1], [0], [0], [1], [0, 0, 1, 1], [], []>} : vector<8x128xf32>, vector<128x128xf32>, vector<8x128xf32> -> vector<8x128xf32>
    %290 = arith.addf %287, %289 : vector<8x128xf32>
    %c0_78 = arith.constant 0 : index
    %c0_79 = arith.constant 0 : index
    %291 = vector.load %arg11[%c0_78, %c0_79] : memref<8x128xf32, #tpu.memory_space<vmem>>, vector<8x128xf32>
    tpu.vector_store %arg11[%c0_78, %c0_79], %290 {strides = array<i32>} : memref<8x128xf32, #tpu.memory_space<vmem>>, vector<8x128xf32>,
    %c0_i32_80 = arith.constant 0 : i32
    %292 = arith.cmpi eq, %arg1, %c0_i32_80 : i32
    %293 = arith.extui %292 : i1 to i32
    %c0_i32_81 = arith.constant 0 : i32
    %294 = arith.cmpi ne, %293, %c0_i32_81 : i32
    scf.if %294 {
      %c0_82 = arith.constant 0 : index
      %c0_83 = arith.constant 0 : index
      %295 = vector.load %arg11[%c0_82, %c0_83] : memref<8x128xf32, #tpu.memory_space<vmem>>, vector<8x128xf32>
      %c0_84 = arith.constant 0 : index
      %c0_85 = arith.constant 0 : index
      %296 = vector.load %arg9[%c0_84, %c0_85] : memref<8x128xf32, #tpu.memory_space<vmem>>, vector<8x128xf32>
      tpu.vector_store %arg9[%c0_84, %c0_85], %295 {strides = array<i32>} : memref<8x128xf32, #tpu.memory_space<vmem>>, vector<8x128xf32>,
    } else {
    }
    return
  }
  func.func @transform_0(%arg0: i32, %arg1: i32) -> (i32, i32) {
    %c0_i32 = arith.constant 0 : i32
    %c0_i32_0 = arith.constant 0 : i32
    return %arg0, %c0_i32 : i32, i32
  }
  func.func @transform_1(%arg0: i32, %arg1: i32) -> (i32, i32) {
    %c0_i32 = arith.constant 0 : i32
    %c0_i32_0 = arith.constant 0 : i32
    %c0_i32_1 = arith.constant 0 : i32
    return %c0_i32, %c0_i32_0 : i32, i32
  }
  func.func @transform_2(%arg0: i32, %arg1: i32) -> (i32, i32) {
    %c0_i32 = arith.constant 0 : i32
    %c0_i32_0 = arith.constant 0 : i32
    return %c0_i32, %arg1 : i32, i32
  }
  func.func @transform_3(%arg0: i32, %arg1: i32) -> (i32, i32) {
    %c0_i32 = arith.constant 0 : i32
    %c0_i32_0 = arith.constant 0 : i32
    return %c0_i32, %arg1 : i32, i32
  }
  func.func @transform_4(%arg0: i32, %arg1: i32) -> (i32, i32) {
    %c0_i32 = arith.constant 0 : i32
    %c0_i32_0 = arith.constant 0 : i32
    return %c0_i32, %arg1 : i32, i32
  }
  func.func @transform_5(%arg0: i32, %arg1: i32) -> (i32, i32) {
    %c0_i32 = arith.constant 0 : i32
    %c0_i32_0 = arith.constant 0 : i32
    return %arg1, %c0_i32 : i32, i32
  }
  func.func @transform_6(%arg0: i32, %arg1: i32) -> (i32, i32) {
    %c0_i32 = arith.constant 0 : i32
    %c0_i32_0 = arith.constant 0 : i32
    return %c0_i32, %arg1 : i32, i32
  }
  func.func @transform_7(%arg0: i32, %arg1: i32) -> (i32, i32) {
    %c0_i32 = arith.constant 0 : i32
    %c0_i32_0 = arith.constant 0 : i32
    return %arg0, %c0_i32 : i32, i32
  }
}

</mosaic_0001>

<llo_original>
// kernel: tpu_custom_call.1
$region0: #{tpu_custom_call.1}
  #allocation0 [shape = 'u32[]', space=smem, size = 0x4, offset = 0x4, fixed_abs, tag = 'smem constant byte address 0x4 - core index']
  #allocation1 [shape = 'u32[144,128]{1,0:T(1,128)}', space=vmem, size = 0x12000, scoped, tag = 'internal scratch']
  #allocation2 [shape = 'f32[8,128]{1,0:T(8,128)}', space=vmem, size = 0x1000, scoped, tag = 'scratch operand']
  #allocation3 [shape = 'f32[8,128]{1,0:T(8,128)}', space=vmem, size = 0x1000, scoped, tag = 'scratch operand']
  %s0 = inlined_call_operand.hbm [shape: f32[16,128], index: 0, kind: input, shape index: {}]
  %s1 = inlined_call_operand.hbm [shape: f32[128,128], index: 1, kind: input, shape index: {}]
  %s2 = inlined_call_operand.hbm [shape: f32[128,128], index: 2, kind: input, shape index: {}]
  %s3 = inlined_call_operand.hbm [shape: f32[128,128], index: 3, kind: input, shape index: {}]
  %s4 = inlined_call_operand.hbm [shape: f32[128,128], index: 4, kind: input, shape index: {}]
  %s5 = inlined_call_operand.hbm [shape: f32[128,128], index: 5, kind: input, shape index: {}]
  %s6 = inlined_call_operand.vmem [shape: f32[1,128], index: 6, kind: input, shape index: {}]
  %s7 = inlined_call_operand.hbm [shape: f32[16,128], index: 7, kind: output, shape index: {}]
  %s8 = sld [smem:[#allocation0]]
  $region93: #{tpu_custom_call.1} parent=0
    _
  %s10 = ssub.s32 1, %s8
  %s11 = scalar_select 0, %s10, %s8
  $region1: #{tpu_custom_call.1} parent=0
    #allocation4 [shape = 'u8[8192]{0}', space=vmem, size = 0x2000, scoped, tag = 'input window, operand 0']
    #allocation5 [shape = 's32[2]{0}', space=sflag, size = 0x8, scoped, tag = 'scoped memory for tpu_custom_call.1']
    #allocation6 [shape = 's32[2]{0}', space=sflag, size = 0x8, scoped, tag = 'scoped memory for tpu_custom_call.1']
    #allocation7 [shape = 'u8[65536]{0}', space=vmem, size = 0x10000, scoped, tag = 'input window, operand 1, single buffered']
    #allocation8 [shape = 's32[1]{0}', space=sflag, size = 0x4, scoped, tag = 'scoped memory for tpu_custom_call.1']
    #allocation9 [shape = 'u8[65536]{0}', space=vmem, size = 0x10000, scoped, tag = 'input window, operand 2, single buffered']
    #allocation10 [shape = 'u8[65536]{0}', space=vmem, size = 0x10000, scoped, tag = 'input window, operand 3, single buffered']
    #allocation11 [shape = 's32[1]{0}', space=sflag, size = 0x4, scoped, tag = 'scoped memory for tpu_custom_call.1']
    #allocation12 [shape = 'u8[65536]{0}', space=vmem, size = 0x10000, scoped, tag = 'input window, operand 4, single buffered']
    #allocation13 [shape = 'u8[65536]{0}', space=vmem, size = 0x10000, scoped, tag = 'input window, operand 5, single buffered']
    #allocation14 [shape = 's32[1]{0}', space=sflag, size = 0x4, scoped, tag = 'scoped memory for tpu_custom_call.1']
    #allocation15 [shape = 'u8[8192]{0}', space=vmem, size = 0x2000, scoped, tag = 'output window, operand 0']
    %12 = vsyncpa [#allocation5], 0
    %s13 = scalar_lea.sflag [#allocation5], 1
    %14 = vsyncpa %s13, 0
    %15 = vsyncpa [#allocation8], 0
    %16 = vsyncpa [#allocation11], 0
    %17 = vsyncpa [#allocation14], 0
    %18 = vsyncpa [#allocation6], 0
    %s19 = scalar_lea.sflag [#allocation6], 1
    %20 = vsyncpa %s19, 0
    loop: start=0, step=1, limit=4
    $region2: #{tpu_custom_call.1} parent=1 // loop_pre_header
      _
    $region3: #{tpu_custom_call.1} parent=1 // loop_header
      %s22 = sphi 0, %s26
      %p23 = scmp.ge.s32.totalorder %s22, 4
      %s29 = sphi 0, %s41
      %s30 = sphi 0, %s37
      %s31 = sphi 0, %s29
      %s32 = sphi 0, %s30
      %s33 = sphi 0, %s31
      %s34 = sphi 0, %s32
      %s44 = sphi 0, %s46
      %s47 = sphi 0, %s44
      %s48 = sphi 0, %s47
      %s64 = sphi 0, %s48
      %s68 = sphi 0, %s68
      %s70 = sphi 0, %s68
      %s71 = sphi 0, %s70
      %s85 = sphi 0, %s71
      %s91 = sphi 0, %s93
      %s94 = sphi 0, %s91
      %s95 = sphi 0, %s94
      %s111 = sphi 0, %s95
      %s117 = sphi 0, %s119
      %s120 = sphi 0, %s117
      %s121 = sphi 0, %s120
      %s137 = sphi 0, %s121
      %s143 = sphi 0, %s145
      %s146 = sphi 0, %s143
      %s147 = sphi 0, %s146
      %s163 = sphi 0, %s147
      %s169 = sphi 0, %s171
      %s172 = sphi 0, %s169
      %s173 = sphi 0, %s172
      %s189 = sphi 0, %s173
      %s195 = sphi 0, %s197
      %s198 = sphi 0, %s195
      %s199 = sphi 0, %s198
      %s215 = sphi 0, %s199
      %s221 = sphi 0, %s223
      %s224 = sphi 0, %s221
      %s225 = sphi 0, %s224
      %s241 = sphi 0, %s225
    $region4: #{tpu_custom_call.1} parent=1 // loop_header_branch
      %25 = sbr.rel (%p23) target = $region8
    $region5: #{tpu_custom_call.1} parent=1 // loop_body
      %s27 = ssub.s32 %s22, 1
      %s28 = ssub.s32 %s22, 2
      %s35 = sadd.s32 1, %s30
      %p36 = scmp.ge.s32.totalorder %s35, 1
      %s37 = scalar_select %p36, 0, %s35
      %s38 = sadd.s32 1, %s29
      %s39 = scalar_select %p36, %s38, %s29
      %p40 = scmp.ge.s32.totalorder %s39, 2
      %s41 = scalar_select %p40, 0, %s39
      %s42 = ssub.s32 %s29, %s41
      %p43 = scmp.eq.s32.totalorder %s42, 0
      %s45 = sadd.s32 %s44, 1
      %s46 = scalar_select %p43, %s44, %s45
      %p49 = pneg %p43
      %p50 = scmp.eq.s32.totalorder %s22, 1
      %p51 = por %p49, %p50
      %p52 = scmp.ne.s32.totalorder %s44, %s47
      %p53 = scmp.eq.s32.totalorder %s22, 0
      %p54 = por %p52, %p53
      %p55 = scmp.ne.s32.totalorder %s44, %s47
      %p56 = scmp.eq.s32.totalorder %s27, 1
      %p57 = por %p55, %p56
      %p58 = scmp.ne.s32.totalorder %s47, %s48
      %p59 = scmp.eq.s32.totalorder %s27, 0
      %p60 = por %p58, %p59
      %p61 = scmp.ne.s32.totalorder %s47, %s48
      %p62 = scmp.eq.s32.totalorder %s28, 1
      %p63 = por %p61, %p62
      %p65 = scmp.ne.s32.totalorder %s48, %s64
      %p66 = scmp.eq.s32.totalorder %s28, 0
      %p67 = por %p65, %p66
      %s69 = sadd.s32 %s68, 1
      %p72 = scmp.eq.s32.totalorder %s22, 1
      %p73 = scmp.ne.s32.totalorder %s68, %s70
      %p74 = scmp.eq.s32.totalorder %s22, 0
      %p75 = por %p73, %p74
      %p76 = scmp.ne.s32.totalorder %s68, %s70
      %p77 = scmp.eq.s32.totalorder %s27, 1
      %p78 = por %p76, %p77
      %p79 = scmp.ne.s32.totalorder %s70, %s71
      %p80 = scmp.eq.s32.totalorder %s27, 0
      %p81 = por %p79, %p80
      %p82 = scmp.ne.s32.totalorder %s70, %s71
      %p83 = scmp.eq.s32.totalorder %s28, 1
      %p84 = por %p82, %p83
      %p86 = scmp.ne.s32.totalorder %s71, %s85
      %p87 = scmp.eq.s32.totalorder %s28, 0
      %p88 = por %p86, %p87
      %s89 = ssub.s32 %s30, %s37
      %p90 = scmp.eq.s32.totalorder %s89, 0
      %s92 = sadd.s32 %s91, 1
      %s93 = scalar_select %p90, %s91, %s92
      %p96 = pneg %p90
      %p97 = scmp.eq.s32.totalorder %s22, 1
      %p98 = por %p96, %p97
      %p99 = scmp.ne.s32.totalorder %s91, %s94
      %p100 = scmp.eq.s32.totalorder %s22, 0
      %p101 = por %p99, %p100
      %p102 = scmp.ne.s32.totalorder %s91, %s94
      %p103 = scmp.eq.s32.totalorder %s27, 1
      %p104 = por %p102, %p103
      %p105 = scmp.ne.s32.totalorder %s94, %s95
      %p106 = scmp.eq.s32.totalorder %s27, 0
      %p107 = por %p105, %p106
      %p108 = scmp.ne.s32.totalorder %s94, %s95
      %p109 = scmp.eq.s32.totalorder %s28, 1
      %p110 = por %p108, %p109
      %p112 = scmp.ne.s32.totalorder %s95, %s111
      %p113 = scmp.eq.s32.totalorder %s28, 0
      %p114 = por %p112, %p113
      %s115 = ssub.s32 %s30, %s37
      %p116 = scmp.eq.s32.totalorder %s115, 0
      %s118 = sadd.s32 %s117, 1
      %s119 = scalar_select %p116, %s117, %s118
      %p122 = pneg %p116
      %p123 = scmp.eq.s32.totalorder %s22, 1
      %p124 = por %p122, %p123
      %p125 = scmp.ne.s32.totalorder %s117, %s120
      %p126 = scmp.eq.s32.totalorder %s22, 0
      %p127 = por %p125, %p126
      %p128 = scmp.ne.s32.totalorder %s117, %s120
      %p129 = scmp.eq.s32.totalorder %s27, 1
      %p130 = por %p128, %p129
      %p131 = scmp.ne.s32.totalorder %s120, %s121
      %p132 = scmp.eq.s32.totalorder %s27, 0
      %p133 = por %p131, %p132
      %p134 = scmp.ne.s32.totalorder %s120, %s121
      %p135 = scmp.eq.s32.totalorder %s28, 1
      %p136 = por %p134, %p135
      %p138 = scmp.ne.s32.totalorder %s121, %s137
      %p139 = scmp.eq.s32.totalorder %s28, 0
      %p140 = por %p138, %p139
      %s141 = ssub.s32 %s30, %s37
      %p142 = scmp.eq.s32.totalorder %s141, 0
      %s144 = sadd.s32 %s143, 1
      %s145 = scalar_select %p142, %s143, %s144
      %p148 = pneg %p142
      %p149 = scmp.eq.s32.totalorder %s22, 1
      %p150 = por %p148, %p149
      %p151 = scmp.ne.s32.totalorder %s143, %s146
      %p152 = scmp.eq.s32.totalorder %s22, 0
      %p153 = por %p151, %p152
      %p154 = scmp.ne.s32.totalorder %s143, %s146
      %p155 = scmp.eq.s32.totalorder %s27, 1
      %p156 = por %p154, %p155
      %p157 = scmp.ne.s32.totalorder %s146, %s147
      %p158 = scmp.eq.s32.totalorder %s27, 0
      %p159 = por %p157, %p158
      %p160 = scmp.ne.s32.totalorder %s146, %s147
      %p161 = scmp.eq.s32.totalorder %s28, 1
      %p162 = por %p160, %p161
      %p164 = scmp.ne.s32.totalorder %s147, %s163
      %p165 = scmp.eq.s32.totalorder %s28, 0
      %p166 = por %p164, %p165
      %s167 = ssub.s32 %s30, %s37
      %p168 = scmp.eq.s32.totalorder %s167, 0
      %s170 = sadd.s32 %s169, 1
      %s171 = scalar_select %p168, %s169, %s170
      %p174 = pneg %p168
      %p175 = scmp.eq.s32.totalorder %s22, 1
      %p176 = por %p174, %p175
      %p177 = scmp.ne.s32.totalorder %s169, %s172
      %p178 = scmp.eq.s32.totalorder %s22, 0
      %p179 = por %p177, %p178
      %p180 = scmp.ne.s32.totalorder %s169, %s172
      %p181 = scmp.eq.s32.totalorder %s27, 1
      %p182 = por %p180, %p181
      %p183 = scmp.ne.s32.totalorder %s172, %s173
      %p184 = scmp.eq.s32.totalorder %s27, 0
      %p185 = por %p183, %p184
      %p186 = scmp.ne.s32.totalorder %s172, %s173
      %p187 = scmp.eq.s32.totalorder %s28, 1
      %p188 = por %p186, %p187
      %p190 = scmp.ne.s32.totalorder %s173, %s189
      %p191 = scmp.eq.s32.totalorder %s28, 0
      %p192 = por %p190, %p191
      %s193 = ssub.s32 %s30, %s37
      %p194 = scmp.eq.s32.totalorder %s193, 0
      %s196 = sadd.s32 %s195, 1
      %s197 = scalar_select %p194, %s195, %s196
      %p200 = pneg %p194
      %p201 = scmp.eq.s32.totalorder %s22, 1
      %p202 = por %p200, %p201
      %p203 = scmp.ne.s32.totalorder %s195, %s198
      %p204 = scmp.eq.s32.totalorder %s22, 0
      %p205 = por %p203, %p204
      %p206 = scmp.ne.s32.totalorder %s195, %s198
      %p207 = scmp.eq.s32.totalorder %s27, 1
      %p208 = por %p206, %p207
      %p209 = scmp.ne.s32.totalorder %s198, %s199
      %p210 = scmp.eq.s32.totalorder %s27, 0
      %p211 = por %p209, %p210
      %p212 = scmp.ne.s32.totalorder %s198, %s199
      %p213 = scmp.eq.s32.totalorder %s28, 1
      %p214 = por %p212, %p213
      %p216 = scmp.ne.s32.totalorder %s199, %s215
      %p217 = scmp.eq.s32.totalorder %s28, 0
      %p218 = por %p216, %p217
      %s219 = ssub.s32 %s29, %s41
      %p220 = scmp.eq.s32.totalorder %s219, 0
      %s222 = sadd.s32 %s221, 1
      %s223 = scalar_select %p220, %s221, %s222
      %p226 = pneg %p220
      %p227 = scmp.eq.s32.totalorder %s22, 1
      %p228 = por %p226, %p227
      %p229 = scmp.ne.s32.totalorder %s221, %s224
      %p230 = scmp.eq.s32.totalorder %s22, 0
      %p231 = por %p229, %p230
      %p232 = scmp.ne.s32.totalorder %s221, %s224
      %p233 = scmp.eq.s32.totalorder %s27, 1
      %p234 = por %p232, %p233
      %p235 = scmp.ne.s32.totalorder %s224, %s225
      %p236 = scmp.eq.s32.totalorder %s27, 0
      %p237 = por %p235, %p236
      %p238 = scmp.ne.s32.totalorder %s224, %s225
      %p239 = scmp.eq.s32.totalorder %s28, 1
      %p240 = por %p238, %p239
      %p242 = scmp.ne.s32.totalorder %s225, %s241
      %p243 = scmp.eq.s32.totalorder %s28, 0
      %p244 = por %p242, %p243
      %p245 = scmp.le.s32.totalorder 1, %s22
      %p246 = scmp.lt.s32.totalorder %s22, 3
      %p247 = pnand %p245, %p246
      %p248 = pneg %p247
      // Predicated region
      $region9: #{tpu_custom_call.1} parent=5 // pred_check
        _
      $region10: #{tpu_custom_call.1} parent=5 // pred_check_branch
        %250 = sbr.rel (%p247) target = $region12
      $region11: #{tpu_custom_call.1} parent=5 // pred_region
        %s251 = ssub.s32 %s22, 1
        // Predicated region
        $region13: #{tpu_custom_call.1} parent=11 // pred_check
          %p252 = pneg %p81
        $region14: #{tpu_custom_call.1} parent=11 // pred_check_branch
          %254 = sbr.rel (%p252) target = $region16
        $region15: #{tpu_custom_call.1} parent=11 // pred_region
          %s256 = ssub.s32 2048, 2048
          %257 = vsyncadd [#allocation8], %s256
          %s258 = sshll.u32 [#allocation7], 4
          %s259 = int_to_ptr.vmem [resolvable:$true] %s258
          %264 = dma.hbm_to_vmem [thread:$0]  %s1, 2048, %s259, [#allocation8], 128, 128, 8
        $region16: #{tpu_custom_call.1} parent=11 // pred_fallthru
          _
        // Predicated region
        $region17: #{tpu_custom_call.1} parent=11 // pred_check
          %p265 = pneg %p107
        $region18: #{tpu_custom_call.1} parent=11 // pred_check_branch
          %267 = sbr.rel (%p265) target = $region20
        $region19: #{tpu_custom_call.1} parent=11 // pred_region
          %s269 = ssub.s32 2048, 2048
          %270 = vsyncadd [#allocation8], %s269
          %s271 = smul.addr %s32, 128
          %s272 = scalar_lea.hbm %s2, %s271
          %s273 = sshll.u32 [#allocation9], 4
          %s274 = int_to_ptr.vmem [resolvable:$true] %s273
          %279 = dma.hbm_to_vmem [thread:$0]  %s272, 2048, %s274, [#allocation8], 128, 128, 8
        $region20: #{tpu_custom_call.1} parent=11 // pred_fallthru
          _
        // Predicated region
        $region21: #{tpu_custom_call.1} parent=11 // pred_check
          %p280 = pneg %p133
        $region22: #{tpu_custom_call.1} parent=11 // pred_check_branch
          %282 = sbr.rel (%p280) target = $region24
        $region23: #{tpu_custom_call.1} parent=11 // pred_region
          %s284 = ssub.s32 2048, 2048
          %285 = vsyncadd [#allocation11], %s284
          %s286 = smul.addr %s32, 128
          %s287 = scalar_lea.hbm %s3, %s286
          %s288 = sshll.u32 [#allocation10], 4
          %s289 = int_to_ptr.vmem [resolvable:$true] %s288
          %294 = dma.hbm_to_vmem [thread:$0]  %s287, 2048, %s289, [#allocation11], 128, 128, 8
        $region24: #{tpu_custom_call.1} parent=11 // pred_fallthru
          _
        // Predicated region
        $region25: #{tpu_custom_call.1} parent=11 // pred_check
          %p295 = pneg %p159
        $region26: #{tpu_custom_call.1} parent=11 // pred_check_branch
          %297 = sbr.rel (%p295) target = $region28
        $region27: #{tpu_custom_call.1} parent=11 // pred_region
          %s299 = ssub.s32 2048, 2048
          %300 = vsyncadd [#allocation11], %s299
          %s301 = smul.addr %s32, 128
          %s302 = scalar_lea.hbm %s4, %s301
          %s303 = sshll.u32 [#allocation12], 4
          %s304 = int_to_ptr.vmem [resolvable:$true] %s303
          %309 = dma.hbm_to_vmem [thread:$0]  %s302, 2048, %s304, [#allocation11], 128, 128, 8
        $region28: #{tpu_custom_call.1} parent=11 // pred_fallthru
          _
        // Predicated region
        $region29: #{tpu_custom_call.1} parent=11 // pred_check
          %p310 = pneg %p185
        $region30: #{tpu_custom_call.1} parent=11 // pred_check_branch
          %312 = sbr.rel (%p310) target = $region32
        $region31: #{tpu_custom_call.1} parent=11 // pred_region
          %s313 = smul.u32 16, %s32
          %s315 = ssub.s32 2048, 2048
          %316 = vsyncadd [#allocation14], %s315
          %s317 = smul.addr %s313, 128
          %s318 = scalar_lea.hbm %s5, %s317
          %s319 = sshll.u32 [#allocation13], 4
          %s320 = int_to_ptr.vmem [resolvable:$true] %s319
          %325 = dma.hbm_to_vmem [thread:$0]  %s318, 2048, %s320, [#allocation14], 128, 128, 8
        $region32: #{tpu_custom_call.1} parent=11 // pred_fallthru
          _
        // Predicated region
        $region33: #{tpu_custom_call.1} parent=11 // pred_check
          %p326 = pneg %p211
        $region34: #{tpu_custom_call.1} parent=11 // pred_check_branch
          %328 = sbr.rel (%p326) target = $region36
        $region35: #{tpu_custom_call.1} parent=11 // pred_region
          %p329 = scmp.lt.s32.totalorder %s32, 0
          %s330 = scalar_select %p329, %s32, 0
          %s331 = scalar_lea.vmem %s6, %s330
        $region36: #{tpu_custom_call.1} parent=11 // pred_fallthru
          _
      $region12: #{tpu_custom_call.1} parent=5 // pred_fallthru
        _
      %p332 = scmp.lt.s32.totalorder %s22, 2
      // Predicated region
      $region37: #{tpu_custom_call.1} parent=5 // pred_check
        %p333 = pneg %p332
      $region38: #{tpu_custom_call.1} parent=5 // pred_check_branch
        %335 = sbr.rel (%p333) target = $region40
      $region39: #{tpu_custom_call.1} parent=5 // pred_region
        // Predicated region
        $region41: #{tpu_custom_call.1} parent=39 // pred_check
          %p336 = pneg %p54
        $region42: #{tpu_custom_call.1} parent=39 // pred_check_branch
          %338 = sbr.rel (%p336) target = $region44
        $region43: #{tpu_custom_call.1} parent=39 // pred_region
          %s339 = sand.u32 %s44, 1
          %s340 = scalar_lea.sflag [#allocation5], %s339
          %s341 = sand.u32 %s44, 1
          %s342 = smul.addr %s341, 8
          %s343 = scalar_lea.vmem [#allocation4], %s342
          %s345 = ssub.s32 128, 128
          %346 = vsyncadd %s340, %s345
          %s347 = smul.addr %s29, 128
          %s348 = scalar_lea.hbm %s0, %s347
          %s350 = sshll.u32 %s343, 4
          %s351 = int_to_ptr.vmem [resolvable:$true] %s350
          %353 = dma.hbm_to_vmem [thread:$0]  %s348, 128, %s351, %s340
        $region44: #{tpu_custom_call.1} parent=39 // pred_fallthru
          _
      $region40: #{tpu_custom_call.1} parent=5 // pred_fallthru
        _
      %p354 = scmp.le.s32.totalorder 1, %s22
      %p355 = scmp.lt.s32.totalorder %s22, 3
      %p356 = pnand %p354, %p355
      %p357 = pneg %p356
      // Predicated region
      $region45: #{tpu_custom_call.1} parent=5 // pred_check
        _
      $region46: #{tpu_custom_call.1} parent=5 // pred_check_branch
        %359 = sbr.rel (%p356) target = $region48
      $region47: #{tpu_custom_call.1} parent=5 // pred_region
        %s360 = ssub.s32 %s22, 1
        %s361 = sand.u32 %s47, 1
        %s362 = scalar_lea.sflag [#allocation5], %s361
        %s363 = sand.u32 %s47, 1
        %s364 = smul.addr %s363, 8
        %s365 = scalar_lea.vmem [#allocation4], %s364
        // Predicated region
        $region49: #{tpu_custom_call.1} parent=47 // pred_check
          %p366 = pneg %p60
        $region50: #{tpu_custom_call.1} parent=47 // pred_check_branch
          %368 = sbr.rel (%p366) target = $region52
        $region51: #{tpu_custom_call.1} parent=47 // pred_region
          %369 = dma.done %s362, 128
        $region52: #{tpu_custom_call.1} parent=47 // pred_fallthru
          _
        // Predicated region
        $region53: #{tpu_custom_call.1} parent=47 // pred_check
          %p370 = pneg %p81
        $region54: #{tpu_custom_call.1} parent=47 // pred_check_branch
          %372 = sbr.rel (%p370) target = $region56
        $region55: #{tpu_custom_call.1} parent=47 // pred_region
          %373 = dma.done [#allocation8], 2048
        $region56: #{tpu_custom_call.1} parent=47 // pred_fallthru
          _
        // Predicated region
        $region57: #{tpu_custom_call.1} parent=47 // pred_check
          %p374 = pneg %p107
        $region58: #{tpu_custom_call.1} parent=47 // pred_check_branch
          %376 = sbr.rel (%p374) target = $region60
        $region59: #{tpu_custom_call.1} parent=47 // pred_region
          %377 = dma.done [#allocation8], 2048
        $region60: #{tpu_custom_call.1} parent=47 // pred_fallthru
          _
        // Predicated region
        $region61: #{tpu_custom_call.1} parent=47 // pred_check
          %p378 = pneg %p133
        $region62: #{tpu_custom_call.1} parent=47 // pred_check_branch
          %380 = sbr.rel (%p378) target = $region64
        $region63: #{tpu_custom_call.1} parent=47 // pred_region
          %381 = dma.done [#allocation11], 2048
        $region64: #{tpu_custom_call.1} parent=47 // pred_fallthru
          _
        // Predicated region
        $region65: #{tpu_custom_call.1} parent=47 // pred_check
          %p382 = pneg %p159
        $region66: #{tpu_custom_call.1} parent=47 // pred_check_branch
          %384 = sbr.rel (%p382) target = $region68
        $region67: #{tpu_custom_call.1} parent=47 // pred_region
          %385 = dma.done [#allocation11], 2048
        $region68: #{tpu_custom_call.1} parent=47 // pred_fallthru
          _
        // Predicated region
        $region69: #{tpu_custom_call.1} parent=47 // pred_check
          %p386 = pneg %p185
        $region70: #{tpu_custom_call.1} parent=47 // pred_check_branch
          %388 = sbr.rel (%p386) target = $region72
        $region71: #{tpu_custom_call.1} parent=47 // pred_region
          %389 = dma.done [#allocation14], 2048
        $region72: #{tpu_custom_call.1} parent=47 // pred_fallthru
          _
        %s390 = sand.u32 %s47, 1
        %s391 = scalar_lea.sflag [#allocation5], %s390
        %s392 = sand.u32 %s47, 1
        %s393 = smul.addr %s392, 8
        %s394 = scalar_lea.vmem [#allocation4], %s393
        %p395 = pneg %p60
        %p396 = pneg %p57
        %p397 = pneg %p81
        %p398 = pneg %p78
        %p399 = pneg %p107
        %p400 = pneg %p104
        %p401 = pneg %p133
        %p402 = pneg %p130
        %p403 = pneg %p159
        %p404 = pneg %p156
        %p405 = pneg %p185
        %p406 = pneg %p182
        %p407 = scmp.lt.s32.totalorder %s32, 0
        %s408 = scalar_select %p407, %s32, 0
        %s409 = scalar_lea.vmem %s6, %s408
        %p410 = pneg %p211
        %p411 = pneg %p208
        %p412 = pneg %p237
        %p413 = pneg %p234
        %s414 = sand.u32 %s224, 1
        %s415 = scalar_lea.sflag [#allocation6], %s414
        %s416 = sand.u32 %s224, 1
        %s417 = smul.addr %s416, 8
        %s418 = scalar_lea.vmem [#allocation15], %s417
        %s419 = smul.u32 16, %s32
        %p420 = scmp.lt.s32.totalorder %s32, 0
        %s421 = scalar_select %p420, %s32, 0
        %s422 = scalar_lea.vmem %s6, %s421
        %v423 = vld [vmem:[%s365] sm:$0xff]
        %p424 = scmp.eq.s32.totalorder %s32, 0
        // Predicated region
        $region73: #{tpu_custom_call.1} parent=47 // pred_check
          %p425 = pneg %p424
        $region74: #{tpu_custom_call.1} parent=47 // pred_check_branch
          %427 = sbr.rel (%p425) target = $region76
        $region75: #{tpu_custom_call.1} parent=47 // pred_region
          %v428 = vld [vmem:[#allocation7] sm:$0xff]
          %v429 = vld [vmem:[#allocation7 + $0x8] sm:$0xff]
          %v430 = vld [vmem:[#allocation7 + $0x10] sm:$0xff]
          %v431 = vld [vmem:[#allocation7 + $0x18] sm:$0xff]
          %v432 = vld [vmem:[#allocation7 + $0x20] sm:$0xff]
          %v433 = vld [vmem:[#allocation7 + $0x28] sm:$0xff]
          %v434 = vld [vmem:[#allocation7 + $0x30] sm:$0xff]
          %v435 = vld [vmem:[#allocation7 + $0x38] sm:$0xff]
          %v436 = vld [vmem:[#allocation7 + $0x40] sm:$0xff]
          %v437 = vld [vmem:[#allocation7 + $0x48] sm:$0xff]
          %v438 = vld [vmem:[#allocation7 + $0x50] sm:$0xff]
          %v439 = vld [vmem:[#allocation7 + $0x58] sm:$0xff]
          %v440 = vld [vmem:[#allocation7 + $0x60] sm:$0xff]
          %v441 = vld [vmem:[#allocation7 + $0x68] sm:$0xff]
          %v442 = vld [vmem:[#allocation7 + $0x70] sm:$0xff]
          %v443 = vld [vmem:[#allocation7 + $0x78] sm:$0xff]
          %444 = vmatprep.subr.mxu0 0.0
          %445 = vmatpush1.msra.mxu0 %v443
          %446 = vmatprep.subr.mxu0 0.0
          %447 = vmatpush1.msra.mxu0 %v442
          %448 = vmatprep.subr.mxu0 0.0
          %449 = vmatpush1.msra.mxu0 %v441
          %450 = vmatprep.subr.mxu0 0.0
          %451 = vmatpush1.msra.mxu0 %v440
          %452 = vmatprep.subr.mxu0 0.0
          %453 = vmatpush1.msra.mxu0 %v439
          %454 = vmatprep.subr.mxu0 0.0
          %455 = vmatpush1.msra.mxu0 %v438
          %456 = vmatprep.subr.mxu0 0.0
          %457 = vmatpush1.msra.mxu0 %v437
          %458 = vmatprep.subr.mxu0 0.0
          %459 = vmatpush1.msra.mxu0 %v436
          %460 = vmatprep.subr.mxu0 0.0
          %461 = vmatpush1.msra.mxu0 %v435
          %462 = vmatprep.subr.mxu0 0.0
          %463 = vmatpush1.msra.mxu0 %v434
          %464 = vmatprep.subr.mxu0 0.0
          %465 = vmatpush1.msra.mxu0 %v433
          %466 = vmatprep.subr.mxu0 0.0
          %467 = vmatpush1.msra.mxu0 %v432
          %468 = vmatprep.subr.mxu0 0.0
          %469 = vmatpush1.msra.mxu0 %v431
          %470 = vmatprep.subr.mxu0 0.0
          %471 = vmatpush1.msra.mxu0 %v430
          %472 = vmatprep.subr.mxu0 0.0
          %473 = vmatpush1.msra.mxu0 %v429
          %474 = vmatprep.subr.mxu0 0.0
          %475 = vmatpush1.msra.mxu0 %v428
          %476 = vmatprep.subr.mxu0 0.0
          %477 = vmatpush2.msra.mxu0 0.0
          %478 = vmatprep.subr.mxu0 0.0
          %479 = vmatpush2.msra.mxu0 0.0
          %480 = vmatprep.subr.mxu0 0.0
          %481 = vmatpush2.msra.mxu0 0.0
          %482 = vmatprep.subr.mxu0 0.0
          %483 = vmatpush2.msra.mxu0 0.0
          %484 = vmatprep.subr.mxu0 0.0
          %485 = vmatpush2.msra.mxu0 0.0
          %486 = vmatprep.subr.mxu0 0.0
          %487 = vmatpush2.msra.mxu0 0.0
          %488 = vmatprep.subr.mxu0 0.0
          %489 = vmatpush2.msra.mxu0 0.0
          %490 = vmatprep.subr.mxu0 0.0
          %491 = vmatpush2.msra.mxu0 0.0
          %492 = vmatprep.subr.mxu0 0.0
          %493 = vmatpush2.msra.mxu0 0.0
          %494 = vmatprep.subr.mxu0 0.0
          %495 = vmatpush2.msra.mxu0 0.0
          %496 = vmatprep.subr.mxu0 0.0
          %497 = vmatpush2.msra.mxu0 0.0
          %498 = vmatprep.subr.mxu0 0.0
          %499 = vmatpush2.msra.mxu0 0.0
          %500 = vmatprep.subr.mxu0 0.0
          %501 = vmatpush2.msra.mxu0 0.0
          %502 = vmatprep.subr.mxu0 0.0
          %503 = vmatpush2.msra.mxu0 0.0
          %504 = vmatprep.subr.mxu0 0.0
          %505 = vmatpush2.msra.mxu0 0.0
          %506 = vmatprep.subr.mxu0 0.0
          %507 = vmatpush2.msra.mxu0 0.0
          %508 = vmatprep.mubr.f32.mxu0 0.0
          %509 = vmatmul.mubr.f32.gmra.mxu0 %v423
          %v510 = vpop.f32.mrf.mxu0
          %v511 = vadd.f32 0.0, %v510
          %v512 = vpop.f32.mrf.mxu0
          %513 = vdwg.mxu0
          %514 = vst [vmem:[#allocation2] sm:$0xff] %v511
          %515 = vst [vmem:[#allocation3] sm:$0xff] 0.0
        $region76: #{tpu_custom_call.1} parent=47 // pred_fallthru
          _
        %v516 = vld [vmem:[#allocation2] sm:$0xff]
        %v517 = vld [vmem:[#allocation9] sm:$0xff]
        %v518 = vld [vmem:[#allocation9 + $0x8] sm:$0xff]
        %v519 = vld [vmem:[#allocation9 + $0x10] sm:$0xff]
        %v520 = vld [vmem:[#allocation9 + $0x18] sm:$0xff]
        %v521 = vld [vmem:[#allocation9 + $0x20] sm:$0xff]
        %v522 = vld [vmem:[#allocation9 + $0x28] sm:$0xff]
        %v523 = vld [vmem:[#allocation9 + $0x30] sm:$0xff]
        %v524 = vld [vmem:[#allocation9 + $0x38] sm:$0xff]
        %v525 = vld [vmem:[#allocation9 + $0x40] sm:$0xff]
        %v526 = vld [vmem:[#allocation9 + $0x48] sm:$0xff]
        %v527 = vld [vmem:[#allocation9 + $0x50] sm:$0xff]
        %v528 = vld [vmem:[#allocation9 + $0x58] sm:$0xff]
        %v529 = vld [vmem:[#allocation9 + $0x60] sm:$0xff]
        %v530 = vld [vmem:[#allocation9 + $0x68] sm:$0xff]
        %v531 = vld [vmem:[#allocation9 + $0x70] sm:$0xff]
        %v532 = vld [vmem:[#allocation9 + $0x78] sm:$0xff]
        %533 = vmatprep.subr.mxu0 0.0
        %534 = vmatpush1.msra.mxu0 %v532
        %535 = vmatprep.subr.mxu0 0.0
        %536 = vmatpush1.msra.mxu0 %v531
        %537 = vmatprep.subr.mxu0 0.0
        %538 = vmatpush1.msra.mxu0 %v530
        %539 = vmatprep.subr.mxu0 0.0
        %540 = vmatpush1.msra.mxu0 %v529
        %541 = vmatprep.subr.mxu0 0.0
        %542 = vmatpush1.msra.mxu0 %v528
        %543 = vmatprep.subr.mxu0 0.0
        %544 = vmatpush1.msra.mxu0 %v527
        %545 = vmatprep.subr.mxu0 0.0
        %546 = vmatpush1.msra.mxu0 %v526
        %547 = vmatprep.subr.mxu0 0.0
        %548 = vmatpush1.msra.mxu0 %v525
        %549 = vmatprep.subr.mxu0 0.0
        %550 = vmatpush1.msra.mxu0 %v524
        %551 = vmatprep.subr.mxu0 0.0
        %552 = vmatpush1.msra.mxu0 %v523
        %553 = vmatprep.subr.mxu0 0.0
        %554 = vmatpush1.msra.mxu0 %v522
        %555 = vmatprep.subr.mxu0 0.0
        %556 = vmatpush1.msra.mxu0 %v521
        %557 = vmatprep.subr.mxu0 0.0
        %558 = vmatpush1.msra.mxu0 %v520
        %559 = vmatprep.subr.mxu0 0.0
        %560 = vmatpush1.msra.mxu0 %v519
        %561 = vmatprep.subr.mxu0 0.0
        %562 = vmatpush1.msra.mxu0 %v518
        %563 = vmatprep.subr.mxu0 0.0
        %564 = vmatpush1.msra.mxu0 %v517
        %565 = vmatprep.subr.mxu0 0.0
        %566 = vmatpush2.msra.mxu0 0.0
        %567 = vmatprep.subr.mxu0 0.0
        %568 = vmatpush2.msra.mxu0 0.0
        %569 = vmatprep.subr.mxu0 0.0
        %570 = vmatpush2.msra.mxu0 0.0
        %571 = vmatprep.subr.mxu0 0.0
        %572 = vmatpush2.msra.mxu0 0.0
        %573 = vmatprep.subr.mxu0 0.0
        %574 = vmatpush2.msra.mxu0 0.0
        %575 = vmatprep.subr.mxu0 0.0
        %576 = vmatpush2.msra.mxu0 0.0
        %577 = vmatprep.subr.mxu0 0.0
        %578 = vmatpush2.msra.mxu0 0.0
        %579 = vmatprep.subr.mxu0 0.0
        %580 = vmatpush2.msra.mxu0 0.0
        %581 = vmatprep.subr.mxu0 0.0
        %582 = vmatpush2.msra.mxu0 0.0
        %583 = vmatprep.subr.mxu0 0.0
        %584 = vmatpush2.msra.mxu0 0.0
        %585 = vmatprep.subr.mxu0 0.0
        %586 = vmatpush2.msra.mxu0 0.0
        %587 = vmatprep.subr.mxu0 0.0
        %588 = vmatpush2.msra.mxu0 0.0
        %589 = vmatprep.subr.mxu0 0.0
        %590 = vmatpush2.msra.mxu0 0.0
        %591 = vmatprep.subr.mxu0 0.0
        %592 = vmatpush2.msra.mxu0 0.0
        %593 = vmatprep.subr.mxu0 0.0
        %594 = vmatpush2.msra.mxu0 0.0
        %595 = vmatprep.subr.mxu0 0.0
        %596 = vmatpush2.msra.mxu0 0.0
        %597 = vmatprep.mubr.f32.mxu0 0.0
        %598 = vmatmul.mubr.f32.gmra.mxu0 %v516
        %v599 = vpop.f32.mrf.mxu0
        %v600 = vadd.f32 0.0, %v599
        %v601 = vpop.f32.mrf.mxu0
        %602 = vdwg.mxu0
        %v603 = vxor.u32 %v600, 2147483648
        %v604 = vmul.f32 %v603, 1.442695
        %v605 = vpow.pop %v604
        %v606 = vadd.f32 %v605, 1.0
        %v607 = vrcp.pop %v606
        %v608 = vmul.f32 1.0, %v607
        %v609 = vld [vmem:[%s422] sm:$0x1]
        %v611 = vlaneseq
        %v612 = vshrl.u32 %v611, 7
        %v613 = vsub.s32 0, %v612
        %v614 = vrot.slane %v609, %v613
        %v616 = vadd.f32 %v608, %v614
        %v617 = vlaneseq
        %v618 = vand.u32 %v617, 127
        %vm619 = vcmp.lt.s32.totalorder %v618, 0
        %v620 = vsub.s32 0, %v618
        %v621 = vsel %vm619, %v620, %v618
        %v622 = vshrl.u32 %v621, 3
        %v623 = vand.u32 %v621, 7
        %v624 = vsub.s32 0, %v623
        %v625 = vsel %vm619, %v624, %v623
        %vm626 = vcmp.ne.s32.totalorder %v625, 0
        %vm627 = vcmp.lt.s32.totalorder %v625, 0
        %vm628 = vmand %vm627, %vm626
        %v629 = vadd.s32 %v625, 8
        %v630 = vsel %vm628, %v629, %v625
        %632 = vrot.lane.b32.xlu0 %v616, 127
        %v633 = vpop.permute.xlu0 %632
        %635 = vrot.lane.b32.xlu0 %v616, 7
        %v636 = vpop.permute.xlu0 %635
        %vm638 = vcmp.lt.s32.totalorder %v630, 7
        %v639 = vsel %vm638, %v633, %v636
        %v640 = vadd.s32 %v630, 1
        %vm641 = vcmp.lt.s32.totalorder %v640, 0
        %v642 = vsub.s32 0, %v640
        %v643 = vsel %vm641, %v642, %v640
        %v644 = vshrl.u32 %v643, 3
        %v645 = vand.u32 %v643, 7
        %v646 = vsub.s32 0, %v645
        %v647 = vsel %vm641, %v646, %v645
        %vm648 = vcmp.ne.s32.totalorder %v647, 0
        %vm649 = vcmp.lt.s32.totalorder %v647, 0
        %vm650 = vmand %vm649, %vm648
        %v651 = vadd.s32 %v647, 8
        %v652 = vsel %vm650, %v651, %v647
        %vm653 = vcmp.gt.f32.partialorder %v639, %v616
        %vm654 = vcmp.eq.f32.partialorder %v639, %v616
        %vm655 = vcmp.lt.s32.totalorder %v652, %v630
        %vm656 = vmand %vm654, %vm655
        %vm657 = vmor %vm653, %vm656
        %v658 = vsel %vm657, 1, 0
        %659 = vrot.lane.b32.xlu0 %v616, 126
        %v660 = vpop.permute.xlu0 %659
        %662 = vrot.lane.b32.xlu0 %v616, 6
        %v663 = vpop.permute.xlu0 %662
        %vm665 = vcmp.lt.s32.totalorder %v630, 6
        %v666 = vsel %vm665, %v660, %v663
        %v667 = vadd.s32 %v630, 2
        %vm668 = vcmp.lt.s32.totalorder %v667, 0
        %v669 = vsub.s32 0, %v667
        %v670 = vsel %vm668, %v669, %v667
        %v671 = vshrl.u32 %v670, 3
        %v672 = vand.u32 %v670, 7
        %v673 = vsub.s32 0, %v672
        %v674 = vsel %vm668, %v673, %v672
        %vm675 = vcmp.ne.s32.totalorder %v674, 0
        %vm676 = vcmp.lt.s32.totalorder %v674, 0
        %vm677 = vmand %vm676, %vm675
        %v678 = vadd.s32 %v674, 8
        %v679 = vsel %vm677, %v678, %v674
        %vm680 = vcmp.gt.f32.partialorder %v666, %v616
        %vm681 = vcmp.eq.f32.partialorder %v666, %v616
        %vm682 = vcmp.lt.s32.totalorder %v679, %v630
        %vm683 = vmand %vm681, %vm682
        %vm684 = vmor %vm680, %vm683
        %v685 = vsel %vm684, 1, 0
        %v686 = vadd.s32 %v658, %v685
        %687 = vrot.lane.b32.xlu0 %v616, 125
        %v688 = vpop.permute.xlu0 %687
        %690 = vrot.lane.b32.xlu0 %v616, 5
        %v691 = vpop.permute.xlu0 %690
        %vm693 = vcmp.lt.s32.totalorder %v630, 5
        %v694 = vsel %vm693, %v688, %v691
        %v695 = vadd.s32 %v630, 3
        %vm696 = vcmp.lt.s32.totalorder %v695, 0
        %v697 = vsub.s32 0, %v695
        %v698 = vsel %vm696, %v697, %v695
        %v699 = vshrl.u32 %v698, 3
        %v700 = vand.u32 %v698, 7
        %v701 = vsub.s32 0, %v700
        %v702 = vsel %vm696, %v701, %v700
        %vm703 = vcmp.ne.s32.totalorder %v702, 0
        %vm704 = vcmp.lt.s32.totalorder %v702, 0
        %vm705 = vmand %vm704, %vm703
        %v706 = vadd.s32 %v702, 8
        %v707 = vsel %vm705, %v706, %v702
        %vm708 = vcmp.gt.f32.partialorder %v694, %v616
        %vm709 = vcmp.eq.f32.partialorder %v694, %v616
        %vm710 = vcmp.lt.s32.totalorder %v707, %v630
        %vm711 = vmand %vm709, %vm710
        %vm712 = vmor %vm708, %vm711
        %v713 = vsel %vm712, 1, 0
        %v714 = vadd.s32 %v686, %v713
        %715 = vrot.lane.b32.xlu0 %v616, 124
        %v716 = vpop.permute.xlu0 %715
        %718 = vrot.lane.b32.xlu0 %v616, 4
        %v719 = vpop.permute.xlu0 %718
        %vm721 = vcmp.lt.s32.totalorder %v630, 4
        %v722 = vsel %vm721, %v716, %v719
        %v723 = vadd.s32 %v630, 4
        %vm724 = vcmp.lt.s32.totalorder %v723, 0
        %v725 = vsub.s32 0, %v723
        %v726 = vsel %vm724, %v725, %v723
        %v727 = vshrl.u32 %v726, 3
        %v728 = vand.u32 %v726, 7
        %v729 = vsub.s32 0, %v728
        %v730 = vsel %vm724, %v729, %v728
        %vm731 = vcmp.ne.s32.totalorder %v730, 0
        %vm732 = vcmp.lt.s32.totalorder %v730, 0
        %vm733 = vmand %vm732, %vm731
        %v734 = vadd.s32 %v730, 8
        %v735 = vsel %vm733, %v734, %v730
        %vm736 = vcmp.gt.f32.partialorder %v722, %v616
        %vm737 = vcmp.eq.f32.partialorder %v722, %v616
        %vm738 = vcmp.lt.s32.totalorder %v735, %v630
        %vm739 = vmand %vm737, %vm738
        %vm740 = vmor %vm736, %vm739
        %v741 = vsel %vm740, 1, 0
        %v742 = vadd.s32 %v714, %v741
        %743 = vrot.lane.b32.xlu0 %v616, 123
        %v744 = vpop.permute.xlu0 %743
        %746 = vrot.lane.b32.xlu0 %v616, 3
        %v747 = vpop.permute.xlu0 %746
        %vm749 = vcmp.lt.s32.totalorder %v630, 3
        %v750 = vsel %vm749, %v744, %v747
        %v751 = vadd.s32 %v630, 5
        %vm752 = vcmp.lt.s32.totalorder %v751, 0
        %v753 = vsub.s32 0, %v751
        %v754 = vsel %vm752, %v753, %v751
        %v755 = vshrl.u32 %v754, 3
        %v756 = vand.u32 %v754, 7
        %v757 = vsub.s32 0, %v756
        %v758 = vsel %vm752, %v757, %v756
        %vm759 = vcmp.ne.s32.totalorder %v758, 0
        %vm760 = vcmp.lt.s32.totalorder %v758, 0
        %vm761 = vmand %vm760, %vm759
        %v762 = vadd.s32 %v758, 8
        %v763 = vsel %vm761, %v762, %v758
        %vm764 = vcmp.gt.f32.partialorder %v750, %v616
        %vm765 = vcmp.eq.f32.partialorder %v750, %v616
        %vm766 = vcmp.lt.s32.totalorder %v763, %v630
        %vm767 = vmand %vm765, %vm766
        %vm768 = vmor %vm764, %vm767
        %v769 = vsel %vm768, 1, 0
        %v770 = vadd.s32 %v742, %v769
        %771 = vrot.lane.b32.xlu0 %v616, 122
        %v772 = vpop.permute.xlu0 %771
        %774 = vrot.lane.b32.xlu0 %v616, 2
        %v775 = vpop.permute.xlu0 %774
        %vm777 = vcmp.lt.s32.totalorder %v630, 2
        %v778 = vsel %vm777, %v772, %v775
        %v779 = vadd.s32 %v630, 6
        %vm780 = vcmp.lt.s32.totalorder %v779, 0
        %v781 = vsub.s32 0, %v779
        %v782 = vsel %vm780, %v781, %v779
        %v783 = vshrl.u32 %v782, 3
        %v784 = vand.u32 %v782, 7
        %v785 = vsub.s32 0, %v784
        %v786 = vsel %vm780, %v785, %v784
        %vm787 = vcmp.ne.s32.totalorder %v786, 0
        %vm788 = vcmp.lt.s32.totalorder %v786, 0
        %vm789 = vmand %vm788, %vm787
        %v790 = vadd.s32 %v786, 8
        %v791 = vsel %vm789, %v790, %v786
        %vm792 = vcmp.gt.f32.partialorder %v778, %v616
        %vm793 = vcmp.eq.f32.partialorder %v778, %v616
        %vm794 = vcmp.lt.s32.totalorder %v791, %v630
        %vm795 = vmand %vm793, %vm794
        %vm796 = vmor %vm792, %vm795
        %v797 = vsel %vm796, 1, 0
        %v798 = vadd.s32 %v770, %v797
        %799 = vrot.lane.b32.xlu0 %v616, 121
        %v800 = vpop.permute.xlu0 %799
        %802 = vrot.lane.b32.xlu0 %v616, 1
        %v803 = vpop.permute.xlu0 %802
        %vm805 = vcmp.lt.s32.totalorder %v630, 1
        %v806 = vsel %vm805, %v800, %v803
        %v807 = vadd.s32 %v630, 7
        %vm808 = vcmp.lt.s32.totalorder %v807, 0
        %v809 = vsub.s32 0, %v807
        %v810 = vsel %vm808, %v809, %v807
        %v811 = vshrl.u32 %v810, 3
        %v812 = vand.u32 %v810, 7
        %v813 = vsub.s32 0, %v812
        %v814 = vsel %vm808, %v813, %v812
        %vm815 = vcmp.ne.s32.totalorder %v814, 0
        %vm816 = vcmp.lt.s32.totalorder %v814, 0
        %vm817 = vmand %vm816, %vm815
        %v818 = vadd.s32 %v814, 8
        %v819 = vsel %vm817, %v818, %v814
        %vm820 = vcmp.gt.f32.partialorder %v806, %v616
        %vm821 = vcmp.eq.f32.partialorder %v806, %v616
        %vm822 = vcmp.lt.s32.totalorder %v819, %v630
        %vm823 = vmand %vm821, %vm822
        %vm824 = vmor %vm820, %vm823
        %v825 = vsel %vm824, 1, 0
        %v826 = vadd.s32 %v798, %v825
        %vm827 = vcmp.lt.s32.totalorder %v826, 2
        %v828 = vsel %vm827, %v608, 0.0
        %v829 = vld [vmem:[#allocation10] sm:$0xff]
        %v830 = vld [vmem:[#allocation10 + $0x8] sm:$0xff]
        %v831 = vld [vmem:[#allocation10 + $0x10] sm:$0xff]
        %v832 = vld [vmem:[#allocation10 + $0x18] sm:$0xff]
        %v833 = vld [vmem:[#allocation10 + $0x20] sm:$0xff]
        %v834 = vld [vmem:[#allocation10 + $0x28] sm:$0xff]
        %v835 = vld [vmem:[#allocation10 + $0x30] sm:$0xff]
        %v836 = vld [vmem:[#allocation10 + $0x38] sm:$0xff]
        %v837 = vld [vmem:[#allocation10 + $0x40] sm:$0xff]
        %v838 = vld [vmem:[#allocation10 + $0x48] sm:$0xff]
        %v839 = vld [vmem:[#allocation10 + $0x50] sm:$0xff]
        %v840 = vld [vmem:[#allocation10 + $0x58] sm:$0xff]
        %v841 = vld [vmem:[#allocation10 + $0x60] sm:$0xff]
        %v842 = vld [vmem:[#allocation10 + $0x68] sm:$0xff]
        %v843 = vld [vmem:[#allocation10 + $0x70] sm:$0xff]
        %v844 = vld [vmem:[#allocation10 + $0x78] sm:$0xff]
        %845 = vmatprep.subr.mxu0 0.0
        %846 = vmatpush1.msra.mxu0 %v844
        %847 = vmatprep.subr.mxu0 0.0
        %848 = vmatpush1.msra.mxu0 %v843
        %849 = vmatprep.subr.mxu0 0.0
        %850 = vmatpush1.msra.mxu0 %v842
        %851 = vmatprep.subr.mxu0 0.0
        %852 = vmatpush1.msra.mxu0 %v841
        %853 = vmatprep.subr.mxu0 0.0
        %854 = vmatpush1.msra.mxu0 %v840
        %855 = vmatprep.subr.mxu0 0.0
        %856 = vmatpush1.msra.mxu0 %v839
        %857 = vmatprep.subr.mxu0 0.0
        %858 = vmatpush1.msra.mxu0 %v838
        %859 = vmatprep.subr.mxu0 0.0
        %860 = vmatpush1.msra.mxu0 %v837
        %861 = vmatprep.subr.mxu0 0.0
        %862 = vmatpush1.msra.mxu0 %v836
        %863 = vmatprep.subr.mxu0 0.0
        %864 = vmatpush1.msra.mxu0 %v835
        %865 = vmatprep.subr.mxu0 0.0
        %866 = vmatpush1.msra.mxu0 %v834
        %867 = vmatprep.subr.mxu0 0.0
        %868 = vmatpush1.msra.mxu0 %v833
        %869 = vmatprep.subr.mxu0 0.0
        %870 = vmatpush1.msra.mxu0 %v832
        %871 = vmatprep.subr.mxu0 0.0
        %872 = vmatpush1.msra.mxu0 %v831
        %873 = vmatprep.subr.mxu0 0.0
        %874 = vmatpush1.msra.mxu0 %v830
        %875 = vmatprep.subr.mxu0 0.0
        %876 = vmatpush1.msra.mxu0 %v829
        %877 = vmatprep.subr.mxu0 0.0
        %878 = vmatpush2.msra.mxu0 0.0
        %879 = vmatprep.subr.mxu0 0.0
        %880 = vmatpush2.msra.mxu0 0.0
        %881 = vmatprep.subr.mxu0 0.0
        %882 = vmatpush2.msra.mxu0 0.0
        %883 = vmatprep.subr.mxu0 0.0
        %884 = vmatpush2.msra.mxu0 0.0
        %885 = vmatprep.subr.mxu0 0.0
        %886 = vmatpush2.msra.mxu0 0.0
        %887 = vmatprep.subr.mxu0 0.0
        %888 = vmatpush2.msra.mxu0 0.0
        %889 = vmatprep.subr.mxu0 0.0
        %890 = vmatpush2.msra.mxu0 0.0
        %891 = vmatprep.subr.mxu0 0.0
        %892 = vmatpush2.msra.mxu0 0.0
        %893 = vmatprep.subr.mxu0 0.0
        %894 = vmatpush2.msra.mxu0 0.0
        %895 = vmatprep.subr.mxu0 0.0
        %896 = vmatpush2.msra.mxu0 0.0
        %897 = vmatprep.subr.mxu0 0.0
        %898 = vmatpush2.msra.mxu0 0.0
        %899 = vmatprep.subr.mxu0 0.0
        %900 = vmatpush2.msra.mxu0 0.0
        %901 = vmatprep.subr.mxu0 0.0
        %902 = vmatpush2.msra.mxu0 0.0
        %903 = vmatprep.subr.mxu0 0.0
        %904 = vmatpush2.msra.mxu0 0.0
        %905 = vmatprep.subr.mxu0 0.0
        %906 = vmatpush2.msra.mxu0 0.0
        %907 = vmatprep.subr.mxu0 0.0
        %908 = vmatpush2.msra.mxu0 0.0
        %909 = vmatprep.mubr.f32.mxu0 0.0
        %910 = vmatmul.mubr.f32.gmra.mxu0 %v423
        %v911 = vpop.f32.mrf.mxu0
        %v912 = vadd.f32 0.0, %v911
        %v913 = vpop.f32.mrf.mxu0
        %914 = vdwg.mxu0
        %v915 = vld [vmem:[#allocation12] sm:$0xff]
        %v916 = vld [vmem:[#allocation12 + $0x8] sm:$0xff]
        %v917 = vld [vmem:[#allocation12 + $0x10] sm:$0xff]
        %v918 = vld [vmem:[#allocation12 + $0x18] sm:$0xff]
        %v919 = vld [vmem:[#allocation12 + $0x20] sm:$0xff]
        %v920 = vld [vmem:[#allocation12 + $0x28] sm:$0xff]
        %v921 = vld [vmem:[#allocation12 + $0x30] sm:$0xff]
        %v922 = vld [vmem:[#allocation12 + $0x38] sm:$0xff]
        %v923 = vld [vmem:[#allocation12 + $0x40] sm:$0xff]
        %v924 = vld [vmem:[#allocation12 + $0x48] sm:$0xff]
        %v925 = vld [vmem:[#allocation12 + $0x50] sm:$0xff]
        %v926 = vld [vmem:[#allocation12 + $0x58] sm:$0xff]
        %v927 = vld [vmem:[#allocation12 + $0x60] sm:$0xff]
        %v928 = vld [vmem:[#allocation12 + $0x68] sm:$0xff]
        %v929 = vld [vmem:[#allocation12 + $0x70] sm:$0xff]
        %v930 = vld [vmem:[#allocation12 + $0x78] sm:$0xff]
        %931 = vmatprep.subr.mxu0 0.0
        %932 = vmatpush1.msra.mxu0 %v930
        %933 = vmatprep.subr.mxu0 0.0
        %934 = vmatpush1.msra.mxu0 %v929
        %935 = vmatprep.subr.mxu0 0.0
        %936 = vmatpush1.msra.mxu0 %v928
        %937 = vmatprep.subr.mxu0 0.0
        %938 = vmatpush1.msra.mxu0 %v927
        %939 = vmatprep.subr.mxu0 0.0
        %940 = vmatpush1.msra.mxu0 %v926
        %941 = vmatprep.subr.mxu0 0.0
        %942 = vmatpush1.msra.mxu0 %v925
        %943 = vmatprep.subr.mxu0 0.0
        %944 = vmatpush1.msra.mxu0 %v924
        %945 = vmatprep.subr.mxu0 0.0
        %946 = vmatpush1.msra.mxu0 %v923
        %947 = vmatprep.subr.mxu0 0.0
        %948 = vmatpush1.msra.mxu0 %v922
        %949 = vmatprep.subr.mxu0 0.0
        %950 = vmatpush1.msra.mxu0 %v921
        %951 = vmatprep.subr.mxu0 0.0
        %952 = vmatpush1.msra.mxu0 %v920
        %953 = vmatprep.subr.mxu0 0.0
        %954 = vmatpush1.msra.mxu0 %v919
        %955 = vmatprep.subr.mxu0 0.0
        %956 = vmatpush1.msra.mxu0 %v918
        %957 = vmatprep.subr.mxu0 0.0
        %958 = vmatpush1.msra.mxu0 %v917
        %959 = vmatprep.subr.mxu0 0.0
        %960 = vmatpush1.msra.mxu0 %v916
        %961 = vmatprep.subr.mxu0 0.0
        %962 = vmatpush1.msra.mxu0 %v915
        %963 = vmatprep.subr.mxu0 0.0
        %964 = vmatpush2.msra.mxu0 0.0
        %965 = vmatprep.subr.mxu0 0.0
        %966 = vmatpush2.msra.mxu0 0.0
        %967 = vmatprep.subr.mxu0 0.0
        %968 = vmatpush2.msra.mxu0 0.0
        %969 = vmatprep.subr.mxu0 0.0
        %970 = vmatpush2.msra.mxu0 0.0
        %971 = vmatprep.subr.mxu0 0.0
        %972 = vmatpush2.msra.mxu0 0.0
        %973 = vmatprep.subr.mxu0 0.0
        %974 = vmatpush2.msra.mxu0 0.0
        %975 = vmatprep.subr.mxu0 0.0
        %976 = vmatpush2.msra.mxu0 0.0
        %977 = vmatprep.subr.mxu0 0.0
        %978 = vmatpush2.msra.mxu0 0.0
        %979 = vmatprep.subr.mxu0 0.0
        %980 = vmatpush2.msra.mxu0 0.0
        %981 = vmatprep.subr.mxu0 0.0
        %982 = vmatpush2.msra.mxu0 0.0
        %983 = vmatprep.subr.mxu0 0.0
        %984 = vmatpush2.msra.mxu0 0.0
        %985 = vmatprep.subr.mxu0 0.0
        %986 = vmatpush2.msra.mxu0 0.0
        %987 = vmatprep.subr.mxu0 0.0
        %988 = vmatpush2.msra.mxu0 0.0
        %989 = vmatprep.subr.mxu0 0.0
        %990 = vmatpush2.msra.mxu0 0.0
        %991 = vmatprep.subr.mxu0 0.0
        %992 = vmatpush2.msra.mxu0 0.0
        %993 = vmatprep.subr.mxu0 0.0
        %994 = vmatpush2.msra.mxu0 0.0
        %995 = vmatprep.mubr.f32.mxu0 0.0
        %996 = vmatmul.mubr.f32.gmra.mxu0 %v423
        %v997 = vpop.f32.mrf.mxu0
        %v998 = vadd.f32 0.0, %v997
        %v999 = vpop.f32.mrf.mxu0
        %1000 = vdwg.mxu0
        %v1001 = vxor.u32 %v912, 2147483648
        %v1002 = vmul.f32 %v1001, 1.442695
        %v1003 = vpow.pop %v1002
        %v1004 = vadd.f32 %v1003, 1.0
        %v1005 = vrcp.pop %v1004
        %v1006 = vmul.f32 1.0, %v1005
        %v1007 = vmul.f32 %v912, %v1006
        %v1008 = vmul.f32 %v828, %v1007
        %v1009 = vmul.f32 %v1008, %v998
        %v1010 = vld [vmem:[#allocation3] sm:$0xff]
        %v1011 = vld [vmem:[#allocation13] sm:$0xff]
        %v1012 = vld [vmem:[#allocation13 + $0x8] sm:$0xff]
        %v1013 = vld [vmem:[#allocation13 + $0x10] sm:$0xff]
        %v1014 = vld [vmem:[#allocation13 + $0x18] sm:$0xff]
        %v1015 = vld [vmem:[#allocation13 + $0x20] sm:$0xff]
        %v1016 = vld [vmem:[#allocation13 + $0x28] sm:$0xff]
        %v1017 = vld [vmem:[#allocation13 + $0x30] sm:$0xff]
        %v1018 = vld [vmem:[#allocation13 + $0x38] sm:$0xff]
        %v1019 = vld [vmem:[#allocation13 + $0x40] sm:$0xff]
        %v1020 = vld [vmem:[#allocation13 + $0x48] sm:$0xff]
        %v1021 = vld [vmem:[#allocation13 + $0x50] sm:$0xff]
        %v1022 = vld [vmem:[#allocation13 + $0x58] sm:$0xff]
        %v1023 = vld [vmem:[#allocation13 + $0x60] sm:$0xff]
        %v1024 = vld [vmem:[#allocation13 + $0x68] sm:$0xff]
        %v1025 = vld [vmem:[#allocation13 + $0x70] sm:$0xff]
        %v1026 = vld [vmem:[#allocation13 + $0x78] sm:$0xff]
        %1027 = vmatprep.subr.mxu0 0.0
        %1028 = vmatpush1.msra.mxu0 %v1026
        %1029 = vmatprep.subr.mxu0 0.0
        %1030 = vmatpush1.msra.mxu0 %v1025
        %1031 = vmatprep.subr.mxu0 0.0
        %1032 = vmatpush1.msra.mxu0 %v1024
        %1033 = vmatprep.subr.mxu0 0.0
        %1034 = vmatpush1.msra.mxu0 %v1023
        %1035 = vmatprep.subr.mxu0 0.0
        %1036 = vmatpush1.msra.mxu0 %v1022
        %1037 = vmatprep.subr.mxu0 0.0
        %1038 = vmatpush1.msra.mxu0 %v1021
        %1039 = vmatprep.subr.mxu0 0.0
        %1040 = vmatpush1.msra.mxu0 %v1020
        %1041 = vmatprep.subr.mxu0 0.0
        %1042 = vmatpush1.msra.mxu0 %v1019
        %1043 = vmatprep.subr.mxu0 0.0
        %1044 = vmatpush1.msra.mxu0 %v1018
        %1045 = vmatprep.subr.mxu0 0.0
        %1046 = vmatpush1.msra.mxu0 %v1017
        %1047 = vmatprep.subr.mxu0 0.0
        %1048 = vmatpush1.msra.mxu0 %v1016
        %1049 = vmatprep.subr.mxu0 0.0
        %1050 = vmatpush1.msra.mxu0 %v1015
        %1051 = vmatprep.subr.mxu0 0.0
        %1052 = vmatpush1.msra.mxu0 %v1014
        %1053 = vmatprep.subr.mxu0 0.0
        %1054 = vmatpush1.msra.mxu0 %v1013
        %1055 = vmatprep.subr.mxu0 0.0
        %1056 = vmatpush1.msra.mxu0 %v1012
        %1057 = vmatprep.subr.mxu0 0.0
        %1058 = vmatpush1.msra.mxu0 %v1011
        %1059 = vmatprep.subr.mxu0 0.0
        %1060 = vmatpush2.msra.mxu0 0.0
        %1061 = vmatprep.subr.mxu0 0.0
        %1062 = vmatpush2.msra.mxu0 0.0
        %1063 = vmatprep.subr.mxu0 0.0
        %1064 = vmatpush2.msra.mxu0 0.0
        %1065 = vmatprep.subr.mxu0 0.0
        %1066 = vmatpush2.msra.mxu0 0.0
        %1067 = vmatprep.subr.mxu0 0.0
        %1068 = vmatpush2.msra.mxu0 0.0
        %1069 = vmatprep.subr.mxu0 0.0
        %1070 = vmatpush2.msra.mxu0 0.0
        %1071 = vmatprep.subr.mxu0 0.0
        %1072 = vmatpush2.msra.mxu0 0.0
        %1073 = vmatprep.subr.mxu0 0.0
        %1074 = vmatpush2.msra.mxu0 0.0
        %1075 = vmatprep.subr.mxu0 0.0
        %1076 = vmatpush2.msra.mxu0 0.0
        %1077 = vmatprep.subr.mxu0 0.0
        %1078 = vmatpush2.msra.mxu0 0.0
        %1079 = vmatprep.subr.mxu0 0.0
        %1080 = vmatpush2.msra.mxu0 0.0
        %1081 = vmatprep.subr.mxu0 0.0
        %1082 = vmatpush2.msra.mxu0 0.0
        %1083 = vmatprep.subr.mxu0 0.0
        %1084 = vmatpush2.msra.mxu0 0.0
        %1085 = vmatprep.subr.mxu0 0.0
        %1086 = vmatpush2.msra.mxu0 0.0
        %1087 = vmatprep.subr.mxu0 0.0
        %1088 = vmatpush2.msra.mxu0 0.0
        %1089 = vmatprep.subr.mxu0 0.0
        %1090 = vmatpush2.msra.mxu0 0.0
        %1091 = vmatprep.mubr.f32.mxu0 0.0
        %1092 = vmatmul.mubr.f32.gmra.mxu0 %v1009
        %v1093 = vpop.f32.mrf.mxu0
        %v1094 = vadd.f32 0.0, %v1093
        %v1095 = vpop.f32.mrf.mxu0
        %1096 = vdwg.mxu0
        %v1097 = vadd.f32 %v1010, %v1094
        %1098 = vst [vmem:[#allocation3] sm:$0xff] %v1097
        // Predicated region
        $region77: #{tpu_custom_call.1} parent=47 // pred_check
          %p1099 = pneg %p424
        $region78: #{tpu_custom_call.1} parent=47 // pred_check_branch
          %1101 = sbr.rel (%p1099) target = $region80
        $region79: #{tpu_custom_call.1} parent=47 // pred_region
          %v1102 = vld [vmem:[#allocation3] sm:$0xff]
          %1103 = vst [vmem:[%s418] sm:$0xff] %v1102
        $region80: #{tpu_custom_call.1} parent=47 // pred_fallthru
          _
        %s1104 = sand.u32 %s224, 1
        %s1105 = scalar_lea.sflag [#allocation6], %s1104
        %s1106 = sand.u32 %s224, 1
        %s1107 = smul.addr %s1106, 8
        %s1108 = scalar_lea.vmem [#allocation15], %s1107
        // Predicated region
        $region81: #{tpu_custom_call.1} parent=47 // pred_check
          %p1109 = pneg %p234
        $region82: #{tpu_custom_call.1} parent=47 // pred_check_branch
          %1111 = sbr.rel (%p1109) target = $region84
        $region83: #{tpu_custom_call.1} parent=47 // pred_region
          %s1113 = ssub.s32 128, 128
          %1114 = vsyncadd %s1105, %s1113
          %s1115 = smul.addr %s31, 128
          %s1116 = scalar_lea.hbm %s7, %s1115
          %s1118 = sshll.u32 %s1108, 4
          %s1119 = int_to_ptr.vmem [resolvable:$true] %s1118
          %1121 = dma.vmem_to_hbm [thread:$0]  %s1119, 128, %s1116, %s1105
        $region84: #{tpu_custom_call.1} parent=47 // pred_fallthru
          _
      $region48: #{tpu_custom_call.1} parent=5 // pred_fallthru
        _
      %p1122 = scmp.le.s32.totalorder 2, %s22
      // Predicated region
      $region85: #{tpu_custom_call.1} parent=5 // pred_check
        %p1123 = pneg %p1122
      $region86: #{tpu_custom_call.1} parent=5 // pred_check_branch
        %1125 = sbr.rel (%p1123) target = $region88
      $region87: #{tpu_custom_call.1} parent=5 // pred_region
        %s1126 = ssub.s32 %s22, 2
        // Predicated region
        $region89: #{tpu_custom_call.1} parent=87 // pred_check
          %p1127 = pneg %p240
        $region90: #{tpu_custom_call.1} parent=87 // pred_check_branch
          %1129 = sbr.rel (%p1127) target = $region92
        $region91: #{tpu_custom_call.1} parent=87 // pred_region
          %s1130 = sand.u32 %s225, 1
          %s1131 = scalar_lea.sflag [#allocation6], %s1130
          %s1132 = sand.u32 %s225, 1
          %s1133 = smul.addr %s1132, 8
          %s1134 = scalar_lea.vmem [#allocation15], %s1133
          %1135 = dma.done %s1131, 128
        $region92: #{tpu_custom_call.1} parent=87 // pred_fallthru
          _
      $region88: #{tpu_custom_call.1} parent=5 // pred_fallthru
        _
    $region6: #{tpu_custom_call.1} parent=1 // loop_footer
      %s26 = sadd.s32 1, %s22
    $region7: #{tpu_custom_call.1} parent=1 // loop_footer_branch
      %21 = sbr.rel target = $region3
    $region8: #{tpu_custom_call.1} parent=1 // loop_exit
      _
    %1136 = vsyncpa [#allocation5], 1
    %s1137 = scalar_lea.sflag [#allocation5], 1
    %1138 = vsyncpa %s1137, 1
    %1139 = vsyncpa [#allocation8], 1
    %1140 = vsyncpa [#allocation11], 1
    %1141 = vsyncpa [#allocation14], 1
    %1142 = vsyncpa [#allocation6], 1
    %s1143 = scalar_lea.sflag [#allocation6], 1
    %1144 = vsyncpa %s1143, 1

</llo_original>
